<compile_context>
chip_gen: v5e
topology: v5e:2x2
jax: 0.10.0
libtpu: 0.0.40
codegen_flags: <defaults>
</compile_context>

<pallas_src>
import functools
import math

import numpy as np

import jax
import jax.numpy as jnp
from jax import lax
from jax.experimental import pallas as pl
from jax.experimental.pallas import tpu as pltpu


# ----------------------------------------------------------------------------
# Fused decoder kernel (single grid step, everything VMEM-resident)
# ----------------------------------------------------------------------------
def _decoder_kernel(dims, eps,
                    x_ref, w_ref, rv_ref, mh_ref, c_ref, wconv_hbm,
                    o_ref,
                    wconv_vmem, conv_sem):
    T, L, BN, NH, NOUT = dims

    # Start the conv-head weight DMA immediately so it overlaps both attention
    # layers (grid=(1,): BlockSpec inputs are already resident; this one is
    # memory_space=ANY and copied manually).
    conv_cp = pltpu.make_async_copy(wconv_hbm, wconv_vmem, conv_sem)
    conv_cp.start()

    W = w_ref[...]            # (L, 4L)      wq*scale | wk | wv | wo (block-diag)
    RV = rv_ref[...]          # (32, L)      row vectors + SegT + Hblk
    Mh = mh_ref[...]          # (NH*T, L)    (seq,head)-block lane mask
    C = c_ref[...]            # (NH*T+L, 16) Bind | SegSum

    bq, bk, bv, bo = RV[0:1], RV[1:2], RV[2:3], RV[3:4]
    gamma, beta, bias_row = RV[4:5], RV[5:6], RV[6:7]
    segT = RV[8:8 + BN]       # (BN, L)  lane-c belongs to sequence c // D
    hblk = RV[16:16 + NH]     # (NH, L)  lane-c belongs to (seq,head) block c // d_k
    bind = C[0:NH * T, 0:NH]  # (NH*T, NH) softmax block-sum indicator
    segsum = C[NH * T:, 0:BN]  # (L, BN)   per-sequence mean weights (already / D)

    wq = W[:, 0:L]
    wkv = W[:, L:3 * L]
    wo = W[:, 3 * L:4 * L]
    bkv = jnp.concatenate([bk, bv], axis=1)          # (1, 2L)

    def cross_attention(q2, kv2):
        # Projections: Q on the query input; K and V share one fused matmul.
        Q = jnp.dot(q2, wq, preferred_element_type=jnp.float32) + bq   # pre-scaled
        KV = jnp.dot(kv2, wkv, preferred_element_type=jnp.float32) + bkv
        K, V = KV[:, 0:L], KV[:, L:2 * L]

        # Per-(seq,head) replication: sublane tile + lane mask (no MXU work).
        K_exp = jnp.concatenate([K] * NH, axis=0) * Mh                 # (NH*T, L)
        V_exp = jnp.concatenate([V] * NH, axis=0) * Mh

        # Scores for all (seq,head) blocks at once: (T, NH*T).
        S = lax.dot_general(Q, K_exp, (((1,), (1,)), ((), ())),
                            preferred_element_type=jnp.float32)
        # Global row max: valid stabilizer (same shift within each block) and
        # overflow-safe.  TODO(synk): use a per-block max if score ranges across
        # blocks can diverge by ~80+.
        S = S - jnp.max(S, axis=-1, keepdims=True)
        P = jnp.exp(S)

        # Per-block softmax denominator via a thin indicator matmul, applied
        # after the AV product, with exact division.
        denom = jnp.dot(P, bind, preferred_element_type=jnp.float32)      # (T, NH)
        o_un = jnp.dot(P, V_exp, preferred_element_type=jnp.float32)      # (T, L)
        denom_l = jnp.dot(denom, hblk, preferred_element_type=jnp.float32)  # (T, L)
        O = o_un / denom_l

        out = jnp.dot(O, wo, preferred_element_type=jnp.float32) + bo + q2  # residual

        # Per-sequence LayerNorm: one thin reduce matmul (mean, E[x^2] stacked
        # on sublanes), one thin broadcast-back matmul.
        o2 = jnp.concatenate([out, out * out], axis=0)                     # (2T, L)
        red = jnp.dot(o2, segsum, preferred_element_type=jnp.float32)      # (2T, BN)
        mu8, m2 = red[0:T], red[T:2 * T]
        var8 = m2 - mu8 * mu8
        stats = jnp.dot(jnp.concatenate([mu8, var8], axis=0), segT,
                        preferred_element_type=jnp.float32)                # (2T, L)
        mu, var = stats[0:T], stats[T:2 * T]
        return (out - mu) * lax.rsqrt(var + eps) * gamma + beta

    # Decoder: attention12 = CA(x2, x1, x1); attention23 = CA(x3, a12, a12).
    a12 = cross_attention(x_ref[1], x_ref[0])
    a23 = cross_attention(x_ref[2], a12)

    # Conv2d prediction head: one matmul against the pre-folded weight
    # (column index = t*NOUT + o), then pick row t / lane block t and sum.
    conv_cp.wait()
    R = jnp.dot(a23, wconv_vmem[...], preferred_element_type=jnp.float32)  # (T, T*NOUT)
    res = R[0:1, 0:NOUT]
    for t in range(1, T):
        res = res + R[t:t + 1, t * NOUT:(t + 1) * NOUT]
    out128 = jnp.concatenate(
        [res, jnp.zeros((1, L - NOUT), jnp.float32)], axis=1) + bias_row
    o_ref[...] = out128.astype(o_ref.dtype)


# ----------------------------------------------------------------------------
# One-time parameter preparation (hoisted out of the forward pass)
# ----------------------------------------------------------------------------
def prepare_params(params, *, B, num_nods, T, d_model, n_head, d_k):
    attn = params["attn"]
    BN = B * num_nods
    D = d_model
    hdk = n_head * d_k
    NH = BN * n_head
    L = BN * D
    assert hdk == D, "kernel assumes n_head * d_k == d_model"
    assert 8 + BN <= 16 and 16 + NH <= 32, "RV slab layout assumes BN<=8, NH<=16"
    scale = 1.0 / math.sqrt(d_k)
    eye_bn = np.eye(BN, dtype=np.float32)

    def bd(w):                  # (a, b) -> block-diag (BN*a, BN*b)
        return np.kron(eye_bn, np.asarray(w, np.float32))

    def rowtile(v):             # (1, a) -> (1, BN*a)
        return np.tile(np.asarray(v, np.float32).reshape(1, -1), (1, BN))

    # Fused projection weight (1/sqrt(d_k) folded into wq / bq).
    W = np.concatenate([bd(attn["wq"]) * scale, bd(attn["wk"]),
                        bd(attn["wv"]), bd(attn["wo"])], axis=1)      # (L, 4L)

    lanes = np.arange(L)
    seq_of_lane = lanes // D       # sequence id per lane (0..BN-1)
    blk_of_lane = lanes // d_k     # (seq, head) block per lane (0..NH-1)

    # Conv2d head folded into one matmul weight; column index = t*NOUT + o.
    w = np.asarray(params["conv_w"], np.float32)     # (Cout, Cin, KH, KW)
    bcv = np.asarray(params["conv_b"], np.float32)   # (Cout,)
    Cout, Cin, KH, KW = w.shape
    assert KH == T and Cin == num_nods, "conv kernel must span full T and all nodes"
    out_w = D - KW + 1
    NOUT = B * Cout * out_w
    assert NOUT <= L
    WL = np.zeros((L, T * NOUT), np.float32)
    for b in range(B):
        for co in range(Cout):
            for wi in range(out_w):
                o = (b * Cout + co) * out_w + wi
                for ci in range(Cin):
                    for kw in range(KW):
                        lane = (b * num_nods + ci) * D + wi + kw
                        WL[lane, np.arange(T) * NOUT + o] = w[co, ci, :, kw]

    # Row-vector / broadcast-indicator slab (32, L):
    #   rows 0..6 : bq*scale, bk, bv, bo, gamma, beta, conv-bias (zero padded)
    #   rows 8..  : SegT  (per-sequence lane indicator, LayerNorm broadcast)
    #   rows 16.. : Hblk  (per-(seq,head) lane indicator, softmax denom broadcast)
    RV = np.zeros((32, L), np.float32)
    RV[0:1] = rowtile(attn["bq"]) * scale
    RV[1:2] = rowtile(attn["bk"])
    RV[2:3] = rowtile(attn["bv"])
    RV[3:4] = rowtile(attn["bo"])
    RV[4:5] = rowtile(attn["gamma"])
    RV[5:6] = rowtile(attn["beta"])
    RV[6, :NOUT] = np.tile(np.repeat(bcv, out_w), B)
    RV[8:8 + BN] = (seq_of_lane[None, :] == np.arange(BN)[:, None]).astype(np.float32)
    RV[16:16 + NH] = (blk_of_lane[None, :] == np.arange(NH)[:, None]).astype(np.float32)

    # (seq,head)-block lane mask for the tiled K / V slabs.
    row_blk = np.repeat(np.arange(NH), T)                                   # (NH*T,)
    Mh = (row_blk[:, None] == blk_of_lane[None, :]).astype(np.float32)      # (NH*T, L)

    # Thin structural constant: Bind (softmax block-sum) over SegSum (LN mean).
    C = np.zeros((NH * T + L, max(NH, BN)), np.float32)
    C[:NH * T, :NH] = (row_blk[:, None] == np.arange(NH)[None, :]).astype(np.float32)
    C[NH * T:, :BN] = (seq_of_lane[:, None] == np.arange(BN)[None, :]).astype(np.float32) / D

    return {"W": jnp.asarray(W), "RV": jnp.asarray(RV), "Mh": jnp.asarray(Mh),
            "C": jnp.asarray(C), "Wconv": jnp.asarray(WL)}


# ----------------------------------------------------------------------------
# Decoder forward: one pallas_call, lane-dense (T, B*N*D) layout
# ----------------------------------------------------------------------------
def decoder_forward(x1, x2, x3, prepped, *, B, num_nods, T, d_model, n_head):
    D = d_model
    BN = B * num_nods
    L = BN * D
    NH = BN * n_head
    NOUT = prepped["Wconv"].shape[1] // T
    out_w = NOUT // BN
    Cout = num_nods

    def lane_pack(x):  # (B, N, T, D) -> (T, B*N*D), lane block s = (b, n)
        return jnp.transpose(x, (2, 0, 1, 3)).reshape(T, L)

    X = jnp.stack([lane_pack(x1), lane_pack(x2), lane_pack(x3)], axis=0)

    kernel = functools.partial(_decoder_kernel, (T, L, BN, NH, NOUT), 1e-5)

    out = pl.pallas_call(
        kernel,
        out_shape=jax.ShapeDtypeStruct((1, L), jnp.float32),
        grid=(1,),                        # fully fused; single launch
        in_specs=[
            pl.BlockSpec(X.shape, lambda i: (0, 0, 0)),
            pl.BlockSpec(prepped["W"].shape, lambda i: (0, 0)),
            pl.BlockSpec(prepped["RV"].shape, lambda i: (0, 0)),
            pl.BlockSpec(prepped["Mh"].shape, lambda i: (0, 0)),
            pl.BlockSpec(prepped["C"].shape, lambda i: (0, 0)),
            pl.BlockSpec(memory_space=pl.ANY),   # conv weight: manual prefetch
        ],
        out_specs=pl.BlockSpec((1, L), lambda i: (0, 0)),
        scratch_shapes=[
            pltpu.VMEM(prepped["Wconv"].shape, jnp.float32),
            pltpu.SemaphoreType.DMA(()),
        ],
        compiler_params=pltpu.CompilerParams(
            dimension_semantics=("arbitrary",)),
    )(X, prepped["W"], prepped["RV"], prepped["Mh"], prepped["C"],
      prepped["Wconv"])

    # Conv output (B, Cout, 1, out_w) permuted to (B, Cout, out_w, 1).
    return out[0, :NOUT].reshape(B, Cout, out_w)[..., None]


# ----------------------------------------------------------------------------
# Pure-JAX reference (for correctness check)
# ----------------------------------------------------------------------------
def _attn_ref(q, k, v, p, n_head, d_k):
    B, N, T, D = q.shape

    def proj(x, w, b):
        return (x @ w + b.reshape(-1)).reshape(B, N, T, n_head, d_k)

    Q = proj(q, p["wq"], p["bq"])
    K = proj(k, p["wk"], p["bk"])
    V = proj(v, p["wv"], p["bv"])
    s = jnp.einsum('bnthd,bnshd->bnhts', Q, K) / math.sqrt(d_k)
    a = jax.nn.softmax(s, axis=-1)
    O = jnp.einsum('bnhts,bnshd->bnthd', a, V).reshape(B, N, T, n_head * d_k)
    out = O @ p["wo"] + p["bo"].reshape(-1) + q
    mu = out.mean(-1, keepdims=True)
    var = ((out - mu) ** 2).mean(-1, keepdims=True)
    return ((out - mu) / jnp.sqrt(var + 1e-5)) * p["gamma"].reshape(-1) \
        + p["beta"].reshape(-1)


def _decoder_ref(x1, x2, x3, params, n_head, d_k):
    a12 = _attn_ref(x2, x1, x1, params["attn"], n_head, d_k)
    a23 = _attn_ref(x3, a12, a12, params["attn"], n_head, d_k)
    conv = lax.conv_general_dilated(
        a23, params["conv_w"], window_strides=(1, 1), padding="VALID",
        dimension_numbers=("NCHW", "OIHW", "NCHW"))
    conv = conv + params["conv_b"].reshape(1, -1, 1, 1)
    return jnp.transpose(conv, (0, 1, 3, 2))


# ----------------------------------------------------------------------------
def init_params(key, n_head, d_k, d_model, num_nods, kh, kw):
    hdk = n_head * d_k
    ks = jax.random.split(key, 10)
    s = 0.1
    attn = {
        "wq": jax.random.normal(ks[0], (d_model, hdk), jnp.float32) * s,
        "bq": jax.random.normal(ks[1], (1, hdk), jnp.float32) * s,
        "wk": jax.random.normal(ks[2], (d_model, hdk), jnp.float32) * s,
        "bk": jax.random.normal(ks[3], (1, hdk), jnp.float32) * s,
        "wv": jax.random.normal(ks[4], (d_model, hdk), jnp.float32) * s,
        "bv": jax.random.normal(ks[5], (1, hdk), jnp.float32) * s,
        "wo": jax.random.normal(ks[6], (hdk, d_model), jnp.float32) * s,
        "bo": jax.random.normal(ks[7], (1, d_model), jnp.float32) * s,
        "gamma": jnp.ones((1, d_model), jnp.float32),
        "beta": jnp.zeros((1, d_model), jnp.float32),
    }
    conv_w = jax.random.normal(ks[8], (num_nods, num_nods, kh, kw),
                               jnp.float32) * s
    conv_b = jax.random.normal(ks[9], (num_nods,), jnp.float32) * s
    return {"attn": attn, "conv_w": conv_w, "conv_b": conv_b}


if __name__ == "__main__":
    # Shapes consistent with the module:
    # Conv2d kernel = (13, d_model - 3) -> T = 13 so out H = 1, out W = 4.
    B, num_nods, T, d_model = 2, 4, 13, 16
    n_head, d_k = 2, 8
    kh, kw = 13, d_model - 3          # (13, 13)

    key = jax.random.PRNGKey(0)
    k1, k2, k3, kp = jax.random.split(key, 4)
    x1 = jax.random.normal(k1, (B, num_nods, T, d_model), jnp.float32)
    x2 = jax.random.normal(k2, (B, num_nods, T, d_model), jnp.float32)
    x3 = jax.random.normal(k3, (B, num_nods, T, d_model), jnp.float32)
    params = init_params(kp, n_head, d_k, d_model, num_nods, kh, kw)

    prepped = prepare_params(params, B=B, num_nods=num_nods, T=T,
                             d_model=d_model, n_head=n_head, d_k=d_k)

    fwd = jax.jit(functools.partial(
        decoder_forward, B=B, num_nods=num_nods, T=T, d_model=d_model,
        n_head=n_head))

    out = jax.block_until_ready(fwd(x1, x2, x3, prepped))
    assert out.shape == (B, num_nods, d_model - kw + 1, 1), out.shape

    ref = jax.block_until_ready(_decoder_ref(x1, x2, x3, params, n_head, d_k))
    # Softmax / LN are exact now; remaining slack covers MXU f32 pass rounding
    # differences between the fused kernel and the XLA reference.
    err = float(jnp.max(jnp.abs(out - ref)))
    assert jnp.allclose(out, ref, atol=2e-2, rtol=2e-2), err

    print("KERNEL_OK")
</pallas_src>

<mosaic_0001>
module attributes {stable_mosaic.version = 11 : i64} {
  func.func @_decoder_kernel(%arg0: i32, %arg1: memref<3x13x128xf32, #tpu.memory_space<vmem>>, %arg2: memref<128x512xf32, #tpu.memory_space<vmem>>, %arg3: memref<32x128xf32, #tpu.memory_space<vmem>>, %arg4: memref<208x128xf32, #tpu.memory_space<vmem>>, %arg5: memref<336x16xf32, #tpu.memory_space<vmem>>, %arg6: memref<128x416xf32, #tpu.memory_space<any>>, %arg7: memref<1x128xf32, #tpu.memory_space<vmem>>, %arg8: memref<128x416xf32, #tpu.memory_space<vmem>>, %arg9: memref<!tpu.dma_semaphore, #tpu.memory_space<semaphore_mem>>) attributes {dimension_semantics = [#tpu.dimension_semantics<arbitrary>], iteration_bounds = array<i64: 1>, scalar_prefetch = 0 : i64, scratch_operands = 2 : i64, tpu.core_type = #tpu.core_type<tc>, window_params = [{pipeline_mode = #tpu.pipeline_mode<synchronous>, transform_indices = @transform_0, window_bounds = array<i64: 3, 13, 128>}, {pipeline_mode = #tpu.pipeline_mode<synchronous>, transform_indices = @transform_1, window_bounds = array<i64: 128, 512>}, {pipeline_mode = #tpu.pipeline_mode<synchronous>, transform_indices = @transform_2, window_bounds = array<i64: 32, 128>}, {pipeline_mode = #tpu.pipeline_mode<synchronous>, transform_indices = @transform_3, window_bounds = array<i64: 208, 128>}, {pipeline_mode = #tpu.pipeline_mode<synchronous>, transform_indices = @transform_4, window_bounds = array<i64: 336, 16>}, {}, {pipeline_mode = #tpu.pipeline_mode<synchronous>, transform_indices = @transform_6, window_bounds = array<i64: 1, 128>}]} {
    tpu.enqueue_dma source(%arg6 : memref<128x416xf32, #tpu.memory_space<any>>) target(%arg8 : memref<128x416xf32, #tpu.memory_space<vmem>>) target_semaphore(%arg9 : memref<!tpu.dma_semaphore, #tpu.memory_space<semaphore_mem>>)
    %c0 = arith.constant 0 : index
    %c0_0 = arith.constant 0 : index
    %0 = vector.load %arg2[%c0, %c0_0] : memref<128x512xf32, #tpu.memory_space<vmem>>, vector<128x512xf32>
    %c0_1 = arith.constant 0 : index
    %c0_2 = arith.constant 0 : index
    %1 = vector.load %arg3[%c0_1, %c0_2] : memref<32x128xf32, #tpu.memory_space<vmem>>, vector<32x128xf32>
    %c0_3 = arith.constant 0 : index
    %c0_4 = arith.constant 0 : index
    %2 = vector.load %arg4[%c0_3, %c0_4] : memref<208x128xf32, #tpu.memory_space<vmem>>, vector<208x128xf32>
    %c0_5 = arith.constant 0 : index
    %c0_6 = arith.constant 0 : index
    %3 = vector.load %arg5[%c0_5, %c0_6] : memref<336x16xf32, #tpu.memory_space<vmem>>, vector<336x16xf32>
    %4 = vector.extract_strided_slice %1 {offsets = [0, 0], sizes = [1, 128], strides = [1, 1]} : vector<32x128xf32> to vector<1x128xf32>
    %5 = vector.extract_strided_slice %1 {offsets = [1, 0], sizes = [1, 128], strides = [1, 1]} : vector<32x128xf32> to vector<1x128xf32>
    %6 = vector.extract_strided_slice %1 {offsets = [2, 0], sizes = [1, 128], strides = [1, 1]} : vector<32x128xf32> to vector<1x128xf32>
    %7 = vector.extract_strided_slice %1 {offsets = [3, 0], sizes = [1, 128], strides = [1, 1]} : vector<32x128xf32> to vector<1x128xf32>
    %8 = vector.extract_strided_slice %1 {offsets = [4, 0], sizes = [1, 128], strides = [1, 1]} : vector<32x128xf32> to vector<1x128xf32>
    %9 = vector.extract_strided_slice %1 {offsets = [5, 0], sizes = [1, 128], strides = [1, 1]} : vector<32x128xf32> to vector<1x128xf32>
    %10 = vector.extract_strided_slice %1 {offsets = [6, 0], sizes = [1, 128], strides = [1, 1]} : vector<32x128xf32> to vector<1x128xf32>
    %11 = vector.extract_strided_slice %1 {offsets = [8, 0], sizes = [8, 128], strides = [1, 1]} : vector<32x128xf32> to vector<8x128xf32>
    %12 = vector.extract_strided_slice %1 {offsets = [16, 0], sizes = [16, 128], strides = [1, 1]} : vector<32x128xf32> to vector<16x128xf32>
    %13 = vector.extract_strided_slice %3 {offsets = [0, 0], sizes = [208, 16], strides = [1, 1]} : vector<336x16xf32> to vector<208x16xf32>
    %14 = vector.extract_strided_slice %3 {offsets = [208, 0], sizes = [128, 8], strides = [1, 1]} : vector<336x16xf32> to vector<128x8xf32>
    %15 = vector.extract_strided_slice %0 {offsets = [0, 0], sizes = [128, 128], strides = [1, 1]} : vector<128x512xf32> to vector<128x128xf32>
    %16 = vector.extract_strided_slice %0 {offsets = [0, 128], sizes = [128, 256], strides = [1, 1]} : vector<128x512xf32> to vector<128x256xf32>
    %17 = vector.extract_strided_slice %0 {offsets = [0, 384], sizes = [128, 128], strides = [1, 1]} : vector<128x512xf32> to vector<128x128xf32>
    %18 = tpu.concatenate %5, %6 in 1 : vector<1x128xf32>, vector<1x128xf32> -> vector<1x256xf32>
    %c1 = arith.constant 1 : index
    %c0_7 = arith.constant 0 : index
    %c0_8 = arith.constant 0 : index
    %19 = vector.load %arg1[%c1, %c0_7, %c0_8] : memref<3x13x128xf32, #tpu.memory_space<vmem>>, vector<1x13x128xf32>
    %20 = vector.shape_cast %19 : vector<1x13x128xf32> to vector<13x128xf32>
    %c0_9 = arith.constant 0 : index
    %c0_10 = arith.constant 0 : index
    %c0_11 = arith.constant 0 : index
    %21 = vector.load %arg1[%c0_9, %c0_10, %c0_11] : memref<3x13x128xf32, #tpu.memory_space<vmem>>, vector<1x13x128xf32>
    %22 = vector.shape_cast %21 : vector<1x13x128xf32> to vector<13x128xf32>
    %cst = arith.constant dense<0.000000e+00> : vector<13x128xf32>
    %23 = tpu.matmul %20, %15, %cst {dimension_numbers = #tpu.dot_dimension_numbers<[1], [0], [0], [1], [0, 0, 1, 1], [], []>} : vector<13x128xf32>, vector<128x128xf32>, vector<13x128xf32> -> vector<13x128xf32>
    %24 = vector.broadcast %4 : vector<1x128xf32> to vector<13x128xf32>
    %25 = arith.addf %23, %24 : vector<13x128xf32>
    %cst_12 = arith.constant dense<0.000000e+00> : vector<13x256xf32>
    %26 = tpu.matmul %22, %16, %cst_12 {dimension_numbers = #tpu.dot_dimension_numbers<[1], [0], [0], [1], [0, 0, 1, 1], [], []>} : vector<13x128xf32>, vector<128x256xf32>, vector<13x256xf32> -> vector<13x256xf32>
    %27 = vector.broadcast %18 : vector<1x256xf32> to vector<13x256xf32>
    %28 = arith.addf %26, %27 : vector<13x256xf32>
    %29 = vector.extract_strided_slice %28 {offsets = [0, 0], sizes = [13, 128], strides = [1, 1]} : vector<13x256xf32> to vector<13x128xf32>
    %30 = vector.extract_strided_slice %28 {offsets = [0, 128], sizes = [13, 128], strides = [1, 1]} : vector<13x256xf32> to vector<13x128xf32>
    %31 = tpu.concatenate %29, %29, %29, %29, %29, %29, %29, %29, %29, %29, %29, %29, %29, %29, %29, %29 in 0 : vector<13x128xf32>, vector<13x128xf32>, vector<13x128xf32>, vector<13x128xf32>, vector<13x128xf32>, vector<13x128xf32>, vector<13x128xf32>, vector<13x128xf32>, vector<13x128xf32>, vector<13x128xf32>, vector<13x128xf32>, vector<13x128xf32>, vector<13x128xf32>, vector<13x128xf32>, vector<13x128xf32>, vector<13x128xf32> -> vector<208x128xf32>
    %32 = arith.mulf %31, %2 : vector<208x128xf32>
    %33 = tpu.concatenate %30, %30, %30, %30, %30, %30, %30, %30, %30, %30, %30, %30, %30, %30, %30, %30 in 0 : vector<13x128xf32>, vector<13x128xf32>, vector<13x128xf32>, vector<13x128xf32>, vector<13x128xf32>, vector<13x128xf32>, vector<13x128xf32>, vector<13x128xf32>, vector<13x128xf32>, vector<13x128xf32>, vector<13x128xf32>, vector<13x128xf32>, vector<13x128xf32>, vector<13x128xf32>, vector<13x128xf32>, vector<13x128xf32> -> vector<208x128xf32>
    %34 = arith.mulf %33, %2 : vector<208x128xf32>
    %cst_13 = arith.constant dense<0.000000e+00> : vector<13x208xf32>
    %35 = tpu.matmul %25, %32, %cst_13 {dimension_numbers = #tpu.dot_dimension_numbers<[1], [1], [0], [0], [0, 0, 1, 0], [], []>} : vector<13x128xf32>, vector<208x128xf32>, vector<13x208xf32> -> vector<13x208xf32>
    %cst_14 = arith.constant dense<0xFF800000> : vector<13xf32>
    %36 = vector.multi_reduction <maximumf>, %35, %cst_14 [1] : vector<13x208xf32> to vector<13xf32>
    %37 = vector.shape_cast %36 : vector<13xf32> to vector<13x1xf32>
    %38 = vector.broadcast %37 : vector<13x1xf32> to vector<13x208xf32>
    %39 = arith.subf %35, %38 : vector<13x208xf32>
    %40 = math.exp %39 : vector<13x208xf32>
    %cst_15 = arith.constant dense<0.000000e+00> : vector<13x16xf32>
    %41 = tpu.matmul %40, %13, %cst_15 {dimension_numbers = #tpu.dot_dimension_numbers<[1], [0], [0], [1], [0, 0, 1, 1], [], []>} : vector<13x208xf32>, vector<208x16xf32>, vector<13x16xf32> -> vector<13x16xf32>
    %cst_16 = arith.constant dense<0.000000e+00> : vector<13x128xf32>
    %42 = tpu.matmul %40, %34, %cst_16 {dimension_numbers = #tpu.dot_dimension_numbers<[1], [0], [0], [1], [0, 0, 1, 1], [], []>} : vector<13x208xf32>, vector<208x128xf32>, vector<13x128xf32> -> vector<13x128xf32>
    %cst_17 = arith.constant dense<0.000000e+00> : vector<13x128xf32>
    %43 = tpu.matmul %41, %12, %cst_17 {dimension_numbers = #tpu.dot_dimension_numbers<[1], [0], [0], [1], [0, 0, 1, 1], [], []>} : vector<13x16xf32>, vector<16x128xf32>, vector<13x128xf32> -> vector<13x128xf32>
    %44 = arith.divf %42, %43 : vector<13x128xf32>
    %cst_18 = arith.constant dense<0.000000e+00> : vector<13x128xf32>
    %45 = tpu.matmul %44, %17, %cst_18 {dimension_numbers = #tpu.dot_dimension_numbers<[1], [0], [0], [1], [0, 0, 1, 1], [], []>} : vector<13x128xf32>, vector<128x128xf32>, vector<13x128xf32> -> vector<13x128xf32>
    %46 = vector.broadcast %7 : vector<1x128xf32> to vector<13x128xf32>
    %47 = arith.addf %45, %46 : vector<13x128xf32>
    %48 = arith.addf %47, %20 : vector<13x128xf32>
    %49 = arith.mulf %48, %48 : vector<13x128xf32>
    %50 = tpu.concatenate %48, %49 in 0 : vector<13x128xf32>, vector<13x128xf32> -> vector<26x128xf32>
    %cst_19 = arith.constant dense<0.000000e+00> : vector<26x8xf32>
    %51 = tpu.matmul %50, %14, %cst_19 {dimension_numbers = #tpu.dot_dimension_numbers<[1], [0], [0], [1], [0, 0, 1, 1], [], []>} : vector<26x128xf32>, vector<128x8xf32>, vector<26x8xf32> -> vector<26x8xf32>
    %52 = vector.extract_strided_slice %51 {offsets = [0, 0], sizes = [13, 8], strides = [1, 1]} : vector<26x8xf32> to vector<13x8xf32>
    %53 = vector.extract_strided_slice %51 {offsets = [13, 0], sizes = [13, 8], strides = [1, 1]} : vector<26x8xf32> to vector<13x8xf32>
    %54 = arith.mulf %52, %52 : vector<13x8xf32>
    %55 = arith.subf %53, %54 : vector<13x8xf32>
    %56 = tpu.concatenate %52, %55 in 0 : vector<13x8xf32>, vector<13x8xf32> -> vector<26x8xf32>
    %cst_20 = arith.constant dense<0.000000e+00> : vector<26x128xf32>
    %57 = tpu.matmul %56, %11, %cst_20 {dimension_numbers = #tpu.dot_dimension_numbers<[1], [0], [0], [1], [0, 0, 1, 1], [], []>} : vector<26x8xf32>, vector<8x128xf32>, vector<26x128xf32> -> vector<26x128xf32>
    %58 = vector.extract_strided_slice %57 {offsets = [0, 0], sizes = [13, 128], strides = [1, 1]} : vector<26x128xf32> to vector<13x128xf32>
    %59 = vector.extract_strided_slice %57 {offsets = [13, 0], sizes = [13, 128], strides = [1, 1]} : vector<26x128xf32> to vector<13x128xf32>
    %60 = arith.subf %48, %58 : vector<13x128xf32>
    %cst_21 = arith.constant 9.99999974E-6 : f32
    %61 = vector.broadcast %cst_21 : f32 to vector<13x128xf32>
    %62 = arith.addf %59, %61 : vector<13x128xf32>
    %63 = math.rsqrt %62 : vector<13x128xf32>
    %64 = arith.mulf %60, %63 : vector<13x128xf32>
    %65 = vector.broadcast %8 : vector<1x128xf32> to vector<13x128xf32>
    %66 = arith.mulf %64, %65 : vector<13x128xf32>
    %67 = vector.broadcast %9 : vector<1x128xf32> to vector<13x128xf32>
    %68 = arith.addf %66, %67 : vector<13x128xf32>
    %c2 = arith.constant 2 : index
    %c0_22 = arith.constant 0 : index
    %c0_23 = arith.constant 0 : index
    %69 = vector.load %arg1[%c2, %c0_22, %c0_23] : memref<3x13x128xf32, #tpu.memory_space<vmem>>, vector<1x13x128xf32>
    %70 = vector.shape_cast %69 : vector<1x13x128xf32> to vector<13x128xf32>
    %cst_24 = arith.constant dense<0.000000e+00> : vector<13x128xf32>
    %71 = tpu.matmul %70, %15, %cst_24 {dimension_numbers = #tpu.dot_dimension_numbers<[1], [0], [0], [1], [0, 0, 1, 1], [], []>} : vector<13x128xf32>, vector<128x128xf32>, vector<13x128xf32> -> vector<13x128xf32>
    %72 = vector.broadcast %4 : vector<1x128xf32> to vector<13x128xf32>
    %73 = arith.addf %71, %72 : vector<13x128xf32>
    %cst_25 = arith.constant dense<0.000000e+00> : vector<13x256xf32>
    %74 = tpu.matmul %68, %16, %cst_25 {dimension_numbers = #tpu.dot_dimension_numbers<[1], [0], [0], [1], [0, 0, 1, 1], [], []>} : vector<13x128xf32>, vector<128x256xf32>, vector<13x256xf32> -> vector<13x256xf32>
    %75 = vector.broadcast %18 : vector<1x256xf32> to vector<13x256xf32>
    %76 = arith.addf %74, %75 : vector<13x256xf32>
    %77 = vector.extract_strided_slice %76 {offsets = [0, 0], sizes = [13, 128], strides = [1, 1]} : vector<13x256xf32> to vector<13x128xf32>
    %78 = vector.extract_strided_slice %76 {offsets = [0, 128], sizes = [13, 128], strides = [1, 1]} : vector<13x256xf32> to vector<13x128xf32>
    %79 = tpu.concatenate %77, %77, %77, %77, %77, %77, %77, %77, %77, %77, %77, %77, %77, %77, %77, %77 in 0 : vector<13x128xf32>, vector<13x128xf32>, vector<13x128xf32>, vector<13x128xf32>, vector<13x128xf32>, vector<13x128xf32>, vector<13x128xf32>, vector<13x128xf32>, vector<13x128xf32>, vector<13x128xf32>, vector<13x128xf32>, vector<13x128xf32>, vector<13x128xf32>, vector<13x128xf32>, vector<13x128xf32>, vector<13x128xf32> -> vector<208x128xf32>
    %80 = arith.mulf %79, %2 : vector<208x128xf32>
    %81 = tpu.concatenate %78, %78, %78, %78, %78, %78, %78, %78, %78, %78, %78, %78, %78, %78, %78, %78 in 0 : vector<13x128xf32>, vector<13x128xf32>, vector<13x128xf32>, vector<13x128xf32>, vector<13x128xf32>, vector<13x128xf32>, vector<13x128xf32>, vector<13x128xf32>, vector<13x128xf32>, vector<13x128xf32>, vector<13x128xf32>, vector<13x128xf32>, vector<13x128xf32>, vector<13x128xf32>, vector<13x128xf32>, vector<13x128xf32> -> vector<208x128xf32>
    %82 = arith.mulf %81, %2 : vector<208x128xf32>
    %cst_26 = arith.constant dense<0.000000e+00> : vector<13x208xf32>
    %83 = tpu.matmul %73, %80, %cst_26 {dimension_numbers = #tpu.dot_dimension_numbers<[1], [1], [0], [0], [0, 0, 1, 0], [], []>} : vector<13x128xf32>, vector<208x128xf32>, vector<13x208xf32> -> vector<13x208xf32>
    %cst_27 = arith.constant dense<0xFF800000> : vector<13xf32>
    %84 = vector.multi_reduction <maximumf>, %83, %cst_27 [1] : vector<13x208xf32> to vector<13xf32>
    %85 = vector.shape_cast %84 : vector<13xf32> to vector<13x1xf32>
    %86 = vector.broadcast %85 : vector<13x1xf32> to vector<13x208xf32>
    %87 = arith.subf %83, %86 : vector<13x208xf32>
    %88 = math.exp %87 : vector<13x208xf32>
    %cst_28 = arith.constant dense<0.000000e+00> : vector<13x16xf32>
    %89 = tpu.matmul %88, %13, %cst_28 {dimension_numbers = #tpu.dot_dimension_numbers<[1], [0], [0], [1], [0, 0, 1, 1], [], []>} : vector<13x208xf32>, vector<208x16xf32>, vector<13x16xf32> -> vector<13x16xf32>
    %cst_29 = arith.constant dense<0.000000e+00> : vector<13x128xf32>
    %90 = tpu.matmul %88, %82, %cst_29 {dimension_numbers = #tpu.dot_dimension_numbers<[1], [0], [0], [1], [0, 0, 1, 1], [], []>} : vector<13x208xf32>, vector<208x128xf32>, vector<13x128xf32> -> vector<13x128xf32>
    %cst_30 = arith.constant dense<0.000000e+00> : vector<13x128xf32>
    %91 = tpu.matmul %89, %12, %cst_30 {dimension_numbers = #tpu.dot_dimension_numbers<[1], [0], [0], [1], [0, 0, 1, 1], [], []>} : vector<13x16xf32>, vector<16x128xf32>, vector<13x128xf32> -> vector<13x128xf32>
    %92 = arith.divf %90, %91 : vector<13x128xf32>
    %cst_31 = arith.constant dense<0.000000e+00> : vector<13x128xf32>
    %93 = tpu.matmul %92, %17, %cst_31 {dimension_numbers = #tpu.dot_dimension_numbers<[1], [0], [0], [1], [0, 0, 1, 1], [], []>} : vector<13x128xf32>, vector<128x128xf32>, vector<13x128xf32> -> vector<13x128xf32>
    %94 = vector.broadcast %7 : vector<1x128xf32> to vector<13x128xf32>
    %95 = arith.addf %93, %94 : vector<13x128xf32>
    %96 = arith.addf %95, %70 : vector<13x128xf32>
    %97 = arith.mulf %96, %96 : vector<13x128xf32>
    %98 = tpu.concatenate %96, %97 in 0 : vector<13x128xf32>, vector<13x128xf32> -> vector<26x128xf32>
    %cst_32 = arith.constant dense<0.000000e+00> : vector<26x8xf32>
    %99 = tpu.matmul %98, %14, %cst_32 {dimension_numbers = #tpu.dot_dimension_numbers<[1], [0], [0], [1], [0, 0, 1, 1], [], []>} : vector<26x128xf32>, vector<128x8xf32>, vector<26x8xf32> -> vector<26x8xf32>
    %100 = vector.extract_strided_slice %99 {offsets = [0, 0], sizes = [13, 8], strides = [1, 1]} : vector<26x8xf32> to vector<13x8xf32>
    %101 = vector.extract_strided_slice %99 {offsets = [13, 0], sizes = [13, 8], strides = [1, 1]} : vector<26x8xf32> to vector<13x8xf32>
    %102 = arith.mulf %100, %100 : vector<13x8xf32>
    %103 = arith.subf %101, %102 : vector<13x8xf32>
    %104 = tpu.concatenate %100, %103 in 0 : vector<13x8xf32>, vector<13x8xf32> -> vector<26x8xf32>
    %cst_33 = arith.constant dense<0.000000e+00> : vector<26x128xf32>
    %105 = tpu.matmul %104, %11, %cst_33 {dimension_numbers = #tpu.dot_dimension_numbers<[1], [0], [0], [1], [0, 0, 1, 1], [], []>} : vector<26x8xf32>, vector<8x128xf32>, vector<26x128xf32> -> vector<26x128xf32>
    %106 = vector.extract_strided_slice %105 {offsets = [0, 0], sizes = [13, 128], strides = [1, 1]} : vector<26x128xf32> to vector<13x128xf32>
    %107 = vector.extract_strided_slice %105 {offsets = [13, 0], sizes = [13, 128], strides = [1, 1]} : vector<26x128xf32> to vector<13x128xf32>
    %108 = arith.subf %96, %106 : vector<13x128xf32>
    %cst_34 = arith.constant 9.99999974E-6 : f32
    %109 = vector.broadcast %cst_34 : f32 to vector<13x128xf32>
    %110 = arith.addf %107, %109 : vector<13x128xf32>
    %111 = math.rsqrt %110 : vector<13x128xf32>
    %112 = arith.mulf %108, %111 : vector<13x128xf32>
    %113 = vector.broadcast %8 : vector<1x128xf32> to vector<13x128xf32>
    %114 = arith.mulf %112, %113 : vector<13x128xf32>
    %115 = vector.broadcast %9 : vector<1x128xf32> to vector<13x128xf32>
    %116 = arith.addf %114, %115 : vector<13x128xf32>
    tpu.wait_dma2 semaphore(%arg9 : memref<!tpu.dma_semaphore, #tpu.memory_space<semaphore_mem>>) src(%arg6 : memref<128x416xf32, #tpu.memory_space<any>>) dst(%arg8 : memref<128x416xf32, #tpu.memory_space<vmem>>)
    %c0_35 = arith.constant 0 : index
    %c0_36 = arith.constant 0 : index
    %117 = vector.load %arg8[%c0_35, %c0_36] : memref<128x416xf32, #tpu.memory_space<vmem>>, vector<128x416xf32>
    %cst_37 = arith.constant dense<0.000000e+00> : vector<13x416xf32>
    %118 = tpu.matmul %116, %117, %cst_37 {dimension_numbers = #tpu.dot_dimension_numbers<[1], [0], [0], [1], [0, 0, 1, 1], [], []>} : vector<13x128xf32>, vector<128x416xf32>, vector<13x416xf32> -> vector<13x416xf32>
    %119 = vector.extract_strided_slice %118 {offsets = [0, 0], sizes = [1, 32], strides = [1, 1]} : vector<13x416xf32> to vector<1x32xf32>
    %120 = vector.extract_strided_slice %118 {offsets = [1, 32], sizes = [1, 32], strides = [1, 1]} : vector<13x416xf32> to vector<1x32xf32>
    %121 = arith.addf %119, %120 : vector<1x32xf32>
    %122 = vector.extract_strided_slice %118 {offsets = [2, 64], sizes = [1, 32], strides = [1, 1]} : vector<13x416xf32> to vector<1x32xf32>
    %123 = arith.addf %121, %122 : vector<1x32xf32>
    %124 = vector.extract_strided_slice %118 {offsets = [3, 96], sizes = [1, 32], strides = [1, 1]} : vector<13x416xf32> to vector<1x32xf32>
    %125 = arith.addf %123, %124 : vector<1x32xf32>
    %126 = vector.extract_strided_slice %118 {offsets = [4, 128], sizes = [1, 32], strides = [1, 1]} : vector<13x416xf32> to vector<1x32xf32>
    %127 = arith.addf %125, %126 : vector<1x32xf32>
    %128 = vector.extract_strided_slice %118 {offsets = [5, 160], sizes = [1, 32], strides = [1, 1]} : vector<13x416xf32> to vector<1x32xf32>
    %129 = arith.addf %127, %128 : vector<1x32xf32>
    %130 = vector.extract_strided_slice %118 {offsets = [6, 192], sizes = [1, 32], strides = [1, 1]} : vector<13x416xf32> to vector<1x32xf32>
    %131 = arith.addf %129, %130 : vector<1x32xf32>
    %132 = vector.extract_strided_slice %118 {offsets = [7, 224], sizes = [1, 32], strides = [1, 1]} : vector<13x416xf32> to vector<1x32xf32>
    %133 = arith.addf %131, %132 : vector<1x32xf32>
    %134 = vector.extract_strided_slice %118 {offsets = [8, 256], sizes = [1, 32], strides = [1, 1]} : vector<13x416xf32> to vector<1x32xf32>
    %135 = arith.addf %133, %134 : vector<1x32xf32>
    %136 = vector.extract_strided_slice %118 {offsets = [9, 288], sizes = [1, 32], strides = [1, 1]} : vector<13x416xf32> to vector<1x32xf32>
    %137 = arith.addf %135, %136 : vector<1x32xf32>
    %138 = vector.extract_strided_slice %118 {offsets = [10, 320], sizes = [1, 32], strides = [1, 1]} : vector<13x416xf32> to vector<1x32xf32>
    %139 = arith.addf %137, %138 : vector<1x32xf32>
    %140 = vector.extract_strided_slice %118 {offsets = [11, 352], sizes = [1, 32], strides = [1, 1]} : vector<13x416xf32> to vector<1x32xf32>
    %141 = arith.addf %139, %140 : vector<1x32xf32>
    %142 = vector.extract_strided_slice %118 {offsets = [12, 384], sizes = [1, 32], strides = [1, 1]} : vector<13x416xf32> to vector<1x32xf32>
    %143 = arith.addf %141, %142 : vector<1x32xf32>
    %cst_38 = arith.constant 0.000000e+00 : f32
    %144 = vector.broadcast %cst_38 : f32 to vector<1x96xf32>
    %145 = tpu.concatenate %143, %144 in 1 : vector<1x32xf32>, vector<1x96xf32> -> vector<1x128xf32>
    %146 = arith.addf %145, %10 : vector<1x128xf32>
    %c0_39 = arith.constant 0 : index
    %c0_40 = arith.constant 0 : index
    %147 = vector.load %arg7[%c0_39, %c0_40] : memref<1x128xf32, #tpu.memory_space<vmem>>, vector<1x128xf32>
    tpu.vector_store %arg7[%c0_39, %c0_40], %146 {strides = array<i32>} : memref<1x128xf32, #tpu.memory_space<vmem>>, vector<1x128xf32>,
    return
  }
  func.func @transform_0(%arg0: i32) -> (i32, i32, i32) {
    %c0_i32 = arith.constant 0 : i32
    %c0_i32_0 = arith.constant 0 : i32
    %c0_i32_1 = arith.constant 0 : i32
    %c0_i32_2 = arith.constant 0 : i32
    return %c0_i32, %c0_i32_0, %c0_i32_1 : i32, i32, i32
  }
  func.func @transform_1(%arg0: i32) -> (i32, i32) {
    %c0_i32 = arith.constant 0 : i32
    %c0_i32_0 = arith.constant 0 : i32
    %c0_i32_1 = arith.constant 0 : i32
    return %c0_i32, %c0_i32_0 : i32, i32
  }
  func.func @transform_2(%arg0: i32) -> (i32, i32) {
    %c0_i32 = arith.constant 0 : i32
    %c0_i32_0 = arith.constant 0 : i32
    %c0_i32_1 = arith.constant 0 : i32
    return %c0_i32, %c0_i32_0 : i32, i32
  }
  func.func @transform_3(%arg0: i32) -> (i32, i32) {
    %c0_i32 = arith.constant 0 : i32
    %c0_i32_0 = arith.constant 0 : i32
    %c0_i32_1 = arith.constant 0 : i32
    return %c0_i32, %c0_i32_0 : i32, i32
  }
  func.func @transform_4(%arg0: i32) -> (i32, i32) {
    %c0_i32 = arith.constant 0 : i32
    %c0_i32_0 = arith.constant 0 : i32
    %c0_i32_1 = arith.constant 0 : i32
    return %c0_i32, %c0_i32_0 : i32, i32
  }
  func.func @transform_6(%arg0: i32) -> (i32, i32) {
    %c0_i32 = arith.constant 0 : i32
    %c0_i32_0 = arith.constant 0 : i32
    %c0_i32_1 = arith.constant 0 : i32
    return %c0_i32, %c0_i32_0 : i32, i32
  }
}

</mosaic_0001>

<llo_original>
// kernel: squeeze.1
$region0: #{squeeze.1}
  %s0 = inlined_call_operand.vmem [shape: f32[32], index: 0, kind: input, shape index: {}]
  %s1 = inlined_call_operand.hbm [shape: f32[2,4,4,1], index: 1, kind: output, shape index: {}]
  $region1: #{squeeze.1} parent=0
    #allocation0 [shape = 'u8[4096]{0}', space=vmem, size = 0x1000, scoped, tag = 'operand span for operand 1']
    #allocation1 [shape = 's32[1]{0}', space=sflag, size = 0x4, scoped, tag = 'scoped memory for squeeze.1']
    #allocation2 [shape = 'u8[8192]{0}', space=vmem, size = 0x2000, scoped, tag = 'scoped mem for output reshape']
    #allocation3 [shape = 'u8[4096]{0}', space=vmem, size = 0x1000, scoped, tag = 'scoped mem for input reshape']
    %2 = vsyncpa [#allocation1], 0
    %s4 = ssub.s32 2, 1
    %v5 = vld [vmem:[%s0] sm:%s4]
    %6 = vst [vmem:[#allocation3] sm:%s4] %v5
    %v7 = vld [vmem:[#allocation3] sm:$0x1]
    %vm8 = vcmask 31744
    %9 = vst.msk [vmem:[#allocation2] sm:$0x1] %vm8, %v7
    %v10 = vld [vmem:[#allocation3] sm:$0x1]
    %11 = vrot.lane.b32.xlu0 %v10, 124
    %v12 = vpop.permute.xlu0 %11
    %vm13 = vcmask 31744
    %s14 = scalar_lea.vmem [#allocation2], 1
    %15 = vst.msk [vmem:[%s14] sm:$0x1] %vm13, %v12
    %v16 = vld [vmem:[#allocation3] sm:$0x1]
    %17 = vrot.lane.b32.xlu0 %v16, 120
    %v18 = vpop.permute.xlu0 %17
    %vm19 = vcmask 31744
    %s20 = scalar_lea.vmem [#allocation2], 2
    %21 = vst.msk [vmem:[%s20] sm:$0x1] %vm19, %v18
    %v22 = vld [vmem:[#allocation3] sm:$0x1]
    %23 = vrot.lane.b32.xlu0 %v22, 116
    %v24 = vpop.permute.xlu0 %23
    %vm25 = vcmask 31744
    %s26 = scalar_lea.vmem [#allocation2], 3
    %27 = vst.msk [vmem:[%s26] sm:$0x1] %vm25, %v24
    %v28 = vld [vmem:[#allocation3] sm:$0x1]
    %29 = vrot.lane.b32.xlu0 %v28, 112
    %v30 = vpop.permute.xlu0 %29
    %vm31 = vcmask 31744
    %s32 = scalar_lea.vmem [#allocation2], 8
    %33 = vst.msk [vmem:[%s32] sm:$0x1] %vm31, %v30
    %v34 = vld [vmem:[#allocation3] sm:$0x1]
    %35 = vrot.lane.b32.xlu0 %v34, 108
    %v36 = vpop.permute.xlu0 %35
    %vm37 = vcmask 31744
    %s38 = scalar_lea.vmem [#allocation2], 9
    %39 = vst.msk [vmem:[%s38] sm:$0x1] %vm37, %v36
    %v40 = vld [vmem:[#allocation3] sm:$0x1]
    %41 = vrot.lane.b32.xlu0 %v40, 104
    %v42 = vpop.permute.xlu0 %41
    %vm43 = vcmask 31744
    %s44 = scalar_lea.vmem [#allocation2], 10
    %45 = vst.msk [vmem:[%s44] sm:$0x1] %vm43, %v42
    %v46 = vld [vmem:[#allocation3] sm:$0x1]
    %47 = vrot.lane.b32.xlu0 %v46, 100
    %v48 = vpop.permute.xlu0 %47
    %vm49 = vcmask 31744
    %s50 = scalar_lea.vmem [#allocation2], 11
    %51 = vst.msk [vmem:[%s50] sm:$0x1] %vm49, %v48
    %s53 = ssub.s32 16, 1
    %v54 = vld [vmem:[#allocation2] sm:%s53]
    %s56 = ssub.s32 16, 1
    %57 = vst [vmem:[#allocation0] sm:%s56] %v54
    %s58 = scalar_lea.vmem [#allocation2], 8
    %v59 = vld [vmem:[%s58] sm:%s53]
    %s61 = ssub.s32 16, 1
    %s62 = scalar_lea.vmem [#allocation0], 4
    %63 = vst [vmem:[%s62] sm:%s61] %v59
    %65 = vsyncadd [#allocation1], 0
    %s67 = sshll.u32 [#allocation0], 4
    %s68 = int_to_ptr.vmem [resolvable:$true] %s67
    %s69 = sshll.u32 %s1, 4
    %s70 = int_to_ptr.hbm [resolvable:$true] %s69
    %72 = dma.vmem_to_hbm [thread:$0]  %s68, 128, %s70, [#allocation1]
    %74 = dma.done [#allocation1], 128
    %75 = vsyncpa [#allocation1], 1

// kernel: decoder_forward.1
$region0: #{decoder_forward.1}
  #allocation0 [shape = 'u32[]', space=smem, size = 0x4, offset = 0x4, fixed_abs, tag = 'smem constant byte address 0x4 - core index']
  #allocation1 [shape = 'u32[72,128]{1,0:T(1,128)}', space=vmem, size = 0x9000, scoped, tag = 'internal scratch']
  #allocation2 [shape = 'f32[128,416]{1,0:T(8,128)}', space=vmem, size = 0x40000, scoped, tag = 'scratch operand']
  #allocation3 [shape = 's32[1]{0}', space=sflag, size = 0x4, scoped, tag = 'scratch operand']
  #allocation4 [shape = 's32[]', space=sflag, size = 0x4, offset = 0, fixed_abs, tag = 'sflag constant byte address 0x0 - dummy sync flag']
  %s0 = inlined_call_operand.vmem [shape: f32[3,13,128], index: 0, kind: input, shape index: {}]
  %s1 = inlined_call_operand.vmem [shape: f32[128,512], index: 1, kind: input, shape index: {}]
  %s2 = inlined_call_operand.vmem [shape: f32[32,128], index: 2, kind: input, shape index: {}]
  %s3 = inlined_call_operand.vmem [shape: f32[208,128], index: 3, kind: input, shape index: {}]
  %s4 = inlined_call_operand.vmem [shape: f32[336,16], index: 4, kind: input, shape index: {}]
  %s5 = inlined_call_operand.vmem [shape: f32[128,416], index: 5, kind: input, shape index: {}]
  %s6 = inlined_call_operand.vmem [shape: f32[1,128], index: 6, kind: output, shape index: {}]
  %s7 = sld [smem:[#allocation0]]
  $region49: #{decoder_forward.1} parent=0
    _
  %s9 = ssub.s32 1, %s7
  %s10 = scalar_select 0, %s9, %s7
  // Predicated region
  $region2: #{decoder_forward.1} parent=0 // pred_check
    _
  $region3: #{decoder_forward.1} parent=0 // pred_check_branch
    %12 = sbr.rel (0) target = $region5
  $region4: #{decoder_forward.1} parent=0 // pred_region
    _
  $region5: #{decoder_forward.1} parent=0 // pred_fallthru
    _
  // Predicated region
  $region6: #{decoder_forward.1} parent=0 // pred_check
    _
  $region7: #{decoder_forward.1} parent=0 // pred_check_branch
    %14 = sbr.rel (0) target = $region9
  $region8: #{decoder_forward.1} parent=0 // pred_region
    _
  $region9: #{decoder_forward.1} parent=0 // pred_fallthru
    _
  // Predicated region
  $region10: #{decoder_forward.1} parent=0 // pred_check
    _
  $region11: #{decoder_forward.1} parent=0 // pred_check_branch
    %16 = sbr.rel (0) target = $region13
  $region12: #{decoder_forward.1} parent=0 // pred_region
    _
  $region13: #{decoder_forward.1} parent=0 // pred_fallthru
    _
  // Predicated region
  $region14: #{decoder_forward.1} parent=0 // pred_check
    _
  $region15: #{decoder_forward.1} parent=0 // pred_check_branch
    %18 = sbr.rel (0) target = $region17
  $region16: #{decoder_forward.1} parent=0 // pred_region
    _
  $region17: #{decoder_forward.1} parent=0 // pred_fallthru
    _
  // Predicated region
  $region18: #{decoder_forward.1} parent=0 // pred_check
    _
  $region19: #{decoder_forward.1} parent=0 // pred_check_branch
    %20 = sbr.rel (0) target = $region21
  $region20: #{decoder_forward.1} parent=0 // pred_region
    _
  $region21: #{decoder_forward.1} parent=0 // pred_fallthru
    _
  // Predicated region
  $region22: #{decoder_forward.1} parent=0 // pred_check
    _
  $region23: #{decoder_forward.1} parent=0 // pred_check_branch
    %22 = sbr.rel (0) target = $region25
  $region24: #{decoder_forward.1} parent=0 // pred_region
    loop: start=0, step=1, limit=1
    $region26: #{decoder_forward.1} parent=24 // loop_pre_header
      _
    $region27: #{decoder_forward.1} parent=24 // loop_header
      %s24 = sphi 0, %s28
      %p25 = scmp.ge.s32.totalorder %s24, 1
      %s29 = sphi %s5, %s5
      %s30 = sphi [#allocation2], [#allocation2]
    $region28: #{decoder_forward.1} parent=24 // loop_header_branch
      %27 = sbr.rel (%p25) target = $region32
    $region29: #{decoder_forward.1} parent=24 // loop_body
      %v31 = vld [vmem:[%s29] sm:$0xff]
      %32 = vst [vmem:[%s30] sm:$0xff] %v31
      %v33 = vld [vmem:[%s29 + $0x8] sm:$0xff]
      %34 = vst [vmem:[%s30 + $0x8] sm:$0xff] %v33
      %v35 = vld [vmem:[%s29 + $0x10] sm:$0xff]
      %36 = vst [vmem:[%s30 + $0x10] sm:$0xff] %v35
      %v37 = vld [vmem:[%s29 + $0x18] sm:$0xff]
      %38 = vst [vmem:[%s30 + $0x18] sm:$0xff] %v37
      %v39 = vld [vmem:[%s29 + $0x20] sm:$0xff]
      %40 = vst [vmem:[%s30 + $0x20] sm:$0xff] %v39
      %v41 = vld [vmem:[%s29 + $0x28] sm:$0xff]
      %42 = vst [vmem:[%s30 + $0x28] sm:$0xff] %v41
      %v43 = vld [vmem:[%s29 + $0x30] sm:$0xff]
      %44 = vst [vmem:[%s30 + $0x30] sm:$0xff] %v43
      %v45 = vld [vmem:[%s29 + $0x38] sm:$0xff]
      %46 = vst [vmem:[%s30 + $0x38] sm:$0xff] %v45
      %v47 = vld [vmem:[%s29 + $0x40] sm:$0xff]
      %48 = vst [vmem:[%s30 + $0x40] sm:$0xff] %v47
      %v49 = vld [vmem:[%s29 + $0x48] sm:$0xff]
      %50 = vst [vmem:[%s30 + $0x48] sm:$0xff] %v49
      %v51 = vld [vmem:[%s29 + $0x50] sm:$0xff]
      %52 = vst [vmem:[%s30 + $0x50] sm:$0xff] %v51
      %v53 = vld [vmem:[%s29 + $0x58] sm:$0xff]
      %54 = vst [vmem:[%s30 + $0x58] sm:$0xff] %v53
      %v55 = vld [vmem:[%s29 + $0x60] sm:$0xff]
      %56 = vst [vmem:[%s30 + $0x60] sm:$0xff] %v55
      %v57 = vld [vmem:[%s29 + $0x68] sm:$0xff]
      %58 = vst [vmem:[%s30 + $0x68] sm:$0xff] %v57
      %v59 = vld [vmem:[%s29 + $0x70] sm:$0xff]
      %60 = vst [vmem:[%s30 + $0x70] sm:$0xff] %v59
      %v61 = vld [vmem:[%s29 + $0x78] sm:$0xff]
      %62 = vst [vmem:[%s30 + $0x78] sm:$0xff] %v61
      %v63 = vld [vmem:[%s29 + $0x80] sm:$0xff]
      %64 = vst [vmem:[%s30 + $0x80] sm:$0xff] %v63
      %v65 = vld [vmem:[%s29 + $0x88] sm:$0xff]
      %66 = vst [vmem:[%s30 + $0x88] sm:$0xff] %v65
      %v67 = vld [vmem:[%s29 + $0x90] sm:$0xff]
      %68 = vst [vmem:[%s30 + $0x90] sm:$0xff] %v67
      %v69 = vld [vmem:[%s29 + $0x98] sm:$0xff]
      %70 = vst [vmem:[%s30 + $0x98] sm:$0xff] %v69
      %v71 = vld [vmem:[%s29 + $0xa0] sm:$0xff]
      %72 = vst [vmem:[%s30 + $0xa0] sm:$0xff] %v71
      %v73 = vld [vmem:[%s29 + $0xa8] sm:$0xff]
      %74 = vst [vmem:[%s30 + $0xa8] sm:$0xff] %v73
      %v75 = vld [vmem:[%s29 + $0xb0] sm:$0xff]
      %76 = vst [vmem:[%s30 + $0xb0] sm:$0xff] %v75
      %v77 = vld [vmem:[%s29 + $0xb8] sm:$0xff]
      %78 = vst [vmem:[%s30 + $0xb8] sm:$0xff] %v77
      %v79 = vld [vmem:[%s29 + $0xc0] sm:$0xff]
      %80 = vst [vmem:[%s30 + $0xc0] sm:$0xff] %v79
      %v81 = vld [vmem:[%s29 + $0xc8] sm:$0xff]
      %82 = vst [vmem:[%s30 + $0xc8] sm:$0xff] %v81
      %v83 = vld [vmem:[%s29 + $0xd0] sm:$0xff]
      %84 = vst [vmem:[%s30 + $0xd0] sm:$0xff] %v83
      %v85 = vld [vmem:[%s29 + $0xd8] sm:$0xff]
      %86 = vst [vmem:[%s30 + $0xd8] sm:$0xff] %v85
      %v87 = vld [vmem:[%s29 + $0xe0] sm:$0xff]
      %88 = vst [vmem:[%s30 + $0xe0] sm:$0xff] %v87
      %v89 = vld [vmem:[%s29 + $0xe8] sm:$0xff]
      %90 = vst [vmem:[%s30 + $0xe8] sm:$0xff] %v89
      %v91 = vld [vmem:[%s29 + $0xf0] sm:$0xff]
      %92 = vst [vmem:[%s30 + $0xf0] sm:$0xff] %v91
      %v93 = vld [vmem:[%s29 + $0xf8] sm:$0xff]
      %94 = vst [vmem:[%s30 + $0xf8] sm:$0xff] %v93
      %v95 = vld [vmem:[%s29 + $0x100] sm:$0xff]
      %96 = vst [vmem:[%s30 + $0x100] sm:$0xff] %v95
      %v97 = vld [vmem:[%s29 + $0x108] sm:$0xff]
      %98 = vst [vmem:[%s30 + $0x108] sm:$0xff] %v97
      %v99 = vld [vmem:[%s29 + $0x110] sm:$0xff]
      %100 = vst [vmem:[%s30 + $0x110] sm:$0xff] %v99
      %v101 = vld [vmem:[%s29 + $0x118] sm:$0xff]
      %102 = vst [vmem:[%s30 + $0x118] sm:$0xff] %v101
      %v103 = vld [vmem:[%s29 + $0x120] sm:$0xff]
      %104 = vst [vmem:[%s30 + $0x120] sm:$0xff] %v103
      %v105 = vld [vmem:[%s29 + $0x128] sm:$0xff]
      %106 = vst [vmem:[%s30 + $0x128] sm:$0xff] %v105
      %v107 = vld [vmem:[%s29 + $0x130] sm:$0xff]
      %108 = vst [vmem:[%s30 + $0x130] sm:$0xff] %v107
      %v109 = vld [vmem:[%s29 + $0x138] sm:$0xff]
      %110 = vst [vmem:[%s30 + $0x138] sm:$0xff] %v109
      %v111 = vld [vmem:[%s29 + $0x140] sm:$0xff]
      %112 = vst [vmem:[%s30 + $0x140] sm:$0xff] %v111
      %v113 = vld [vmem:[%s29 + $0x148] sm:$0xff]
      %114 = vst [vmem:[%s30 + $0x148] sm:$0xff] %v113
      %v115 = vld [vmem:[%s29 + $0x150] sm:$0xff]
      %116 = vst [vmem:[%s30 + $0x150] sm:$0xff] %v115
      %v117 = vld [vmem:[%s29 + $0x158] sm:$0xff]
      %118 = vst [vmem:[%s30 + $0x158] sm:$0xff] %v117
      %v119 = vld [vmem:[%s29 + $0x160] sm:$0xff]
      %120 = vst [vmem:[%s30 + $0x160] sm:$0xff] %v119
      %v121 = vld [vmem:[%s29 + $0x168] sm:$0xff]
      %122 = vst [vmem:[%s30 + $0x168] sm:$0xff] %v121
      %v123 = vld [vmem:[%s29 + $0x170] sm:$0xff]
      %124 = vst [vmem:[%s30 + $0x170] sm:$0xff] %v123
      %v125 = vld [vmem:[%s29 + $0x178] sm:$0xff]
      %126 = vst [vmem:[%s30 + $0x178] sm:$0xff] %v125
      %v127 = vld [vmem:[%s29 + $0x180] sm:$0xff]
      %128 = vst [vmem:[%s30 + $0x180] sm:$0xff] %v127
      %v129 = vld [vmem:[%s29 + $0x188] sm:$0xff]
      %130 = vst [vmem:[%s30 + $0x188] sm:$0xff] %v129
      %v131 = vld [vmem:[%s29 + $0x190] sm:$0xff]
      %132 = vst [vmem:[%s30 + $0x190] sm:$0xff] %v131
      %v133 = vld [vmem:[%s29 + $0x198] sm:$0xff]
      %134 = vst [vmem:[%s30 + $0x198] sm:$0xff] %v133
      %v135 = vld [vmem:[%s29 + $0x1a0] sm:$0xff]
      %136 = vst [vmem:[%s30 + $0x1a0] sm:$0xff] %v135
      %v137 = vld [vmem:[%s29 + $0x1a8] sm:$0xff]
      %138 = vst [vmem:[%s30 + $0x1a8] sm:$0xff] %v137
      %v139 = vld [vmem:[%s29 + $0x1b0] sm:$0xff]
      %140 = vst [vmem:[%s30 + $0x1b0] sm:$0xff] %v139
      %v141 = vld [vmem:[%s29 + $0x1b8] sm:$0xff]
      %142 = vst [vmem:[%s30 + $0x1b8] sm:$0xff] %v141
      %v143 = vld [vmem:[%s29 + $0x1c0] sm:$0xff]
      %144 = vst [vmem:[%s30 + $0x1c0] sm:$0xff] %v143
      %v145 = vld [vmem:[%s29 + $0x1c8] sm:$0xff]
      %146 = vst [vmem:[%s30 + $0x1c8] sm:$0xff] %v145
      %v147 = vld [vmem:[%s29 + $0x1d0] sm:$0xff]
      %148 = vst [vmem:[%s30 + $0x1d0] sm:$0xff] %v147
      %v149 = vld [vmem:[%s29 + $0x1d8] sm:$0xff]
      %150 = vst [vmem:[%s30 + $0x1d8] sm:$0xff] %v149
      %v151 = vld [vmem:[%s29 + $0x1e0] sm:$0xff]
      %152 = vst [vmem:[%s30 + $0x1e0] sm:$0xff] %v151
      %v153 = vld [vmem:[%s29 + $0x1e8] sm:$0xff]
      %154 = vst [vmem:[%s30 + $0x1e8] sm:$0xff] %v153
      %v155 = vld [vmem:[%s29 + $0x1f0] sm:$0xff]
      %156 = vst [vmem:[%s30 + $0x1f0] sm:$0xff] %v155
      %v157 = vld [vmem:[%s29 + $0x1f8] sm:$0xff]
      %158 = vst [vmem:[%s30 + $0x1f8] sm:$0xff] %v157
    $region30: #{decoder_forward.1} parent=24 // loop_footer
      %s28 = sadd.s32 1, %s24
    $region31: #{decoder_forward.1} parent=24 // loop_footer_branch
      %23 = sbr.rel target = $region27
    $region32: #{decoder_forward.1} parent=24 // loop_exit
      _
  $region25: #{decoder_forward.1} parent=0 // pred_fallthru
    _
  // Predicated region
  $region33: #{decoder_forward.1} parent=0 // pred_check
    _
  $region34: #{decoder_forward.1} parent=0 // pred_check_branch
    %160 = sbr.rel target = $region36
  $region35: #{decoder_forward.1} parent=0 // pred_region
    _
  $region36: #{decoder_forward.1} parent=0 // pred_fallthru
    _
  // Predicated region
  $region37: #{decoder_forward.1} parent=0 // pred_check
    _
  $region38: #{decoder_forward.1} parent=0 // pred_check_branch
    %163 = sbr.rel (0) target = $region40
  $region39: #{decoder_forward.1} parent=0 // pred_region
    %164 = vsyncadd [#allocation3], 8192
  $region40: #{decoder_forward.1} parent=0 // pred_fallthru
    _
  %v165 = vld [vmem:[%s1] sm:$0xff]
  %v166 = vld [vmem:[%s1 + $0x8] sm:$0xff]
  %v167 = vld [vmem:[%s1 + $0x10] sm:$0xff]
  %v168 = vld [vmem:[%s1 + $0x18] sm:$0xff]
  %v169 = vld [vmem:[%s1 + $0x20] sm:$0xff]
  %v170 = vld [vmem:[%s1 + $0x28] sm:$0xff]
  %v171 = vld [vmem:[%s1 + $0x30] sm:$0xff]
  %v172 = vld [vmem:[%s1 + $0x38] sm:$0xff]
  %v173 = vld [vmem:[%s1 + $0x40] sm:$0xff]
  %v174 = vld [vmem:[%s1 + $0x48] sm:$0xff]
  %v175 = vld [vmem:[%s1 + $0x50] sm:$0xff]
  %v176 = vld [vmem:[%s1 + $0x58] sm:$0xff]
  %v177 = vld [vmem:[%s1 + $0x60] sm:$0xff]
  %v178 = vld [vmem:[%s1 + $0x68] sm:$0xff]
  %v179 = vld [vmem:[%s1 + $0x70] sm:$0xff]
  %v180 = vld [vmem:[%s1 + $0x78] sm:$0xff]
  %v181 = vld [vmem:[%s1 + $0x80] sm:$0xff]
  %v182 = vld [vmem:[%s1 + $0x88] sm:$0xff]
  %v183 = vld [vmem:[%s1 + $0x90] sm:$0xff]
  %v184 = vld [vmem:[%s1 + $0x98] sm:$0xff]
  %v185 = vld [vmem:[%s1 + $0xa0] sm:$0xff]
  %v186 = vld [vmem:[%s1 + $0xa8] sm:$0xff]
  %v187 = vld [vmem:[%s1 + $0xb0] sm:$0xff]
  %v188 = vld [vmem:[%s1 + $0xb8] sm:$0xff]
  %v189 = vld [vmem:[%s1 + $0xc0] sm:$0xff]
  %v190 = vld [vmem:[%s1 + $0xc8] sm:$0xff]
  %v191 = vld [vmem:[%s1 + $0xd0] sm:$0xff]
  %v192 = vld [vmem:[%s1 + $0xd8] sm:$0xff]
  %v193 = vld [vmem:[%s1 + $0xe0] sm:$0xff]
  %v194 = vld [vmem:[%s1 + $0xe8] sm:$0xff]
  %v195 = vld [vmem:[%s1 + $0xf0] sm:$0xff]
  %v196 = vld [vmem:[%s1 + $0xf8] sm:$0xff]
  %v197 = vld [vmem:[%s1 + $0x100] sm:$0xff]
  %v198 = vld [vmem:[%s1 + $0x108] sm:$0xff]
  %v199 = vld [vmem:[%s1 + $0x110] sm:$0xff]
  %v200 = vld [vmem:[%s1 + $0x118] sm:$0xff]
  %v201 = vld [vmem:[%s1 + $0x120] sm:$0xff]
  %v202 = vld [vmem:[%s1 + $0x128] sm:$0xff]
  %v203 = vld [vmem:[%s1 + $0x130] sm:$0xff]
  %v204 = vld [vmem:[%s1 + $0x138] sm:$0xff]
  %v205 = vld [vmem:[%s1 + $0x140] sm:$0xff]
  %v206 = vld [vmem:[%s1 + $0x148] sm:$0xff]
  %v207 = vld [vmem:[%s1 + $0x150] sm:$0xff]
  %v208 = vld [vmem:[%s1 + $0x158] sm:$0xff]
  %v209 = vld [vmem:[%s1 + $0x160] sm:$0xff]
  %v210 = vld [vmem:[%s1 + $0x168] sm:$0xff]
  %v211 = vld [vmem:[%s1 + $0x170] sm:$0xff]
  %v212 = vld [vmem:[%s1 + $0x178] sm:$0xff]
  %v213 = vld [vmem:[%s1 + $0x180] sm:$0xff]
  %v214 = vld [vmem:[%s1 + $0x188] sm:$0xff]
  %v215 = vld [vmem:[%s1 + $0x190] sm:$0xff]
  %v216 = vld [vmem:[%s1 + $0x198] sm:$0xff]
  %v217 = vld [vmem:[%s1 + $0x1a0] sm:$0xff]
  %v218 = vld [vmem:[%s1 + $0x1a8] sm:$0xff]
  %v219 = vld [vmem:[%s1 + $0x1b0] sm:$0xff]
  %v220 = vld [vmem:[%s1 + $0x1b8] sm:$0xff]
  %v221 = vld [vmem:[%s1 + $0x1c0] sm:$0xff]
  %v222 = vld [vmem:[%s1 + $0x1c8] sm:$0xff]
  %v223 = vld [vmem:[%s1 + $0x1d0] sm:$0xff]
  %v224 = vld [vmem:[%s1 + $0x1d8] sm:$0xff]
  %v225 = vld [vmem:[%s1 + $0x1e0] sm:$0xff]
  %v226 = vld [vmem:[%s1 + $0x1e8] sm:$0xff]
  %v227 = vld [vmem:[%s1 + $0x1f0] sm:$0xff]
  %v228 = vld [vmem:[%s1 + $0x1f8] sm:$0xff]
  %v229 = vld [vmem:[%s2] sm:$0xff]
  %v230 = vld [vmem:[%s2 + $0x8] sm:$0xff]
  %v231 = vld [vmem:[%s2 + $0x10] sm:$0xff]
  %v232 = vld [vmem:[%s2 + $0x18] sm:$0xff]
  %v233 = vld [vmem:[%s3] sm:$0xff]
  %v234 = vld [vmem:[%s3 + $0x8] sm:$0xff]
  %v235 = vld [vmem:[%s3 + $0x10] sm:$0xff]
  %v236 = vld [vmem:[%s3 + $0x18] sm:$0xff]
  %v237 = vld [vmem:[%s3 + $0x20] sm:$0xff]
  %v238 = vld [vmem:[%s3 + $0x28] sm:$0xff]
  %v239 = vld [vmem:[%s3 + $0x30] sm:$0xff]
  %v240 = vld [vmem:[%s3 + $0x38] sm:$0xff]
  %v241 = vld [vmem:[%s3 + $0x40] sm:$0xff]
  %v242 = vld [vmem:[%s3 + $0x48] sm:$0xff]
  %v243 = vld [vmem:[%s3 + $0x50] sm:$0xff]
  %v244 = vld [vmem:[%s3 + $0x58] sm:$0xff]
  %v245 = vld [vmem:[%s3 + $0x60] sm:$0xff]
  %v246 = vld [vmem:[%s3 + $0x68] sm:$0xff]
  %v247 = vld [vmem:[%s3 + $0x70] sm:$0xff]
  %v248 = vld [vmem:[%s3 + $0x78] sm:$0xff]
  %v249 = vld [vmem:[%s3 + $0x80] sm:$0xff]
  %v250 = vld [vmem:[%s3 + $0x88] sm:$0xff]
  %v251 = vld [vmem:[%s3 + $0x90] sm:$0xff]
  %v252 = vld [vmem:[%s3 + $0x98] sm:$0xff]
  %v253 = vld [vmem:[%s3 + $0xa0] sm:$0xff]
  %v254 = vld [vmem:[%s3 + $0xa8] sm:$0xff]
  %v255 = vld [vmem:[%s3 + $0xb0] sm:$0xff]
  %v256 = vld [vmem:[%s3 + $0xb8] sm:$0xff]
  %v257 = vld [vmem:[%s3 + $0xc0] sm:$0xff]
  %v258 = vld [vmem:[%s3 + $0xc8] sm:$0xff]
  %v259 = vld [vmem:[%s4] sm:$0xff]
  %v260 = vld [vmem:[%s4 + $0x8] sm:$0xff]
  %v261 = vld [vmem:[%s4 + $0x10] sm:$0xff]
  %v262 = vld [vmem:[%s4 + $0x18] sm:$0xff]
  %v263 = vld [vmem:[%s4 + $0x20] sm:$0xff]
  %v264 = vld [vmem:[%s4 + $0x28] sm:$0xff]
  %v265 = vld [vmem:[%s4 + $0x30] sm:$0xff]
  %v266 = vld [vmem:[%s4 + $0x38] sm:$0xff]
  %v267 = vld [vmem:[%s4 + $0x40] sm:$0xff]
  %v268 = vld [vmem:[%s4 + $0x48] sm:$0xff]
  %v269 = vld [vmem:[%s4 + $0x50] sm:$0xff]
  %v270 = vld [vmem:[%s4 + $0x58] sm:$0xff]
  %v271 = vld [vmem:[%s4 + $0x60] sm:$0xff]
  %v272 = vld [vmem:[%s4 + $0x68] sm:$0xff]
  %v273 = vld [vmem:[%s4 + $0x70] sm:$0xff]
  %v274 = vld [vmem:[%s4 + $0x78] sm:$0xff]
  %v275 = vld [vmem:[%s4 + $0x80] sm:$0xff]
  %v276 = vld [vmem:[%s4 + $0x88] sm:$0xff]
  %v277 = vld [vmem:[%s4 + $0x90] sm:$0xff]
  %v278 = vld [vmem:[%s4 + $0x98] sm:$0xff]
  %v279 = vld [vmem:[%s4 + $0xa0] sm:$0xff]
  %v280 = vld [vmem:[%s4 + $0xa8] sm:$0xff]
  %v281 = vld [vmem:[%s4 + $0xb0] sm:$0xff]
  %v282 = vld [vmem:[%s4 + $0xb8] sm:$0xff]
  %v283 = vld [vmem:[%s4 + $0xc0] sm:$0xff]
  %v284 = vld [vmem:[%s4 + $0xc8] sm:$0xff]
  %v285 = vld [vmem:[%s4 + $0xd0] sm:$0xff]
  %v286 = vld [vmem:[%s4 + $0xd8] sm:$0xff]
  %v287 = vld [vmem:[%s4 + $0xe0] sm:$0xff]
  %v288 = vld [vmem:[%s4 + $0xe8] sm:$0xff]
  %v289 = vld [vmem:[%s4 + $0xf0] sm:$0xff]
  %v290 = vld [vmem:[%s4 + $0xf8] sm:$0xff]
  %v291 = vld [vmem:[%s4 + $0x100] sm:$0xff]
  %v292 = vld [vmem:[%s4 + $0x108] sm:$0xff]
  %v293 = vld [vmem:[%s4 + $0x110] sm:$0xff]
  %v294 = vld [vmem:[%s4 + $0x118] sm:$0xff]
  %v295 = vld [vmem:[%s4 + $0x120] sm:$0xff]
  %v296 = vld [vmem:[%s4 + $0x128] sm:$0xff]
  %v297 = vld [vmem:[%s4 + $0x130] sm:$0xff]
  %v298 = vld [vmem:[%s4 + $0x138] sm:$0xff]
  %v299 = vld [vmem:[%s4 + $0x140] sm:$0xff]
  %v300 = vld [vmem:[%s4 + $0x148] sm:$0xff]
  %v302 = vrot.slane %v229, 1
  %s304 = scalar_lea.vmem %s0, 16
  %v305 = vld [vmem:[%s304] sm:$0xff]
  %v306 = vld [vmem:[%s304 + $0x8] sm:$0x1f]
  %v307 = vld [vmem:[%s0] sm:$0xff]
  %v308 = vld [vmem:[%s0 + $0x8] sm:$0x1f]
  %v309 = vperm.slane %v229, 0
  %310 = vmatpush.msra.mxu0 %v225
  %311 = vmatpush.msra.mxu0 %v221
  %312 = vmatpush.msra.mxu0 %v217
  %313 = vmatpush.msra.mxu0 %v213
  %314 = vmatpush.msra.mxu0 %v209
  %315 = vmatpush.msra.mxu0 %v205
  %316 = vmatpush.msra.mxu0 %v201
  %317 = vmatpush.msra.mxu0 %v197
  %318 = vmatpush.msra.mxu0 %v193
  %319 = vmatpush.msra.mxu0 %v189
  %320 = vmatpush.msra.mxu0 %v185
  %321 = vmatpush.msra.mxu0 %v181
  %322 = vmatpush.msra.mxu0 %v177
  %323 = vmatpush.msra.mxu0 %v173
  %324 = vmatpush.msra.mxu0 %v169
  %325 = vmatpush.msra.mxu0 %v165
  %326 = vmatmul.f32.gmra.mxu0 %v305
  %v327 = vpop.f32.mrf.mxu0
  %v328 = vadd.f32 %v309, %v327
  %329 = vmatmul.f32.gmra.mxu0 %v306
  %v330 = vpop.f32.mrf.mxu0
  %v331 = vadd.f32 %v309, %v330
  %332 = vdwg.mxu0
  %v333 = vperm.slane %v229, 1
  %v334 = vperm.slane %v302, 1
  %335 = vmatpush.msra.mxu0 %v226
  %336 = vmatpush.msra.mxu0 %v222
  %337 = vmatpush.msra.mxu0 %v218
  %338 = vmatpush.msra.mxu0 %v214
  %339 = vmatpush.msra.mxu0 %v210
  %340 = vmatpush.msra.mxu0 %v206
  %341 = vmatpush.msra.mxu0 %v202
  %342 = vmatpush.msra.mxu0 %v198
  %343 = vmatpush.msra.mxu0 %v194
  %344 = vmatpush.msra.mxu0 %v190
  %345 = vmatpush.msra.mxu0 %v186
  %346 = vmatpush.msra.mxu0 %v182
  %347 = vmatpush.msra.mxu0 %v178
  %348 = vmatpush.msra.mxu0 %v174
  %349 = vmatpush.msra.mxu0 %v170
  %350 = vmatpush.msra.mxu0 %v166
  %351 = vmatmul.f32.gmra.mxu0 %v307
  %v352 = vpop.f32.mrf.mxu0
  %v353 = vadd.f32 %v333, %v352
  %354 = vmatmul.f32.gmra.mxu0 %v308
  %v355 = vpop.f32.mrf.mxu0
  %v356 = vadd.f32 %v333, %v355
  %357 = vdwg.mxu0
  %358 = vmatpush.msra.mxu0 %v227
  %359 = vmatpush.msra.mxu0 %v223
  %360 = vmatpush.msra.mxu0 %v219
  %361 = vmatpush.msra.mxu0 %v215
  %362 = vmatpush.msra.mxu0 %v211
  %363 = vmatpush.msra.mxu0 %v207
  %364 = vmatpush.msra.mxu0 %v203
  %365 = vmatpush.msra.mxu0 %v199
  %366 = vmatpush.msra.mxu0 %v195
  %367 = vmatpush.msra.mxu0 %v191
  %368 = vmatpush.msra.mxu0 %v187
  %369 = vmatpush.msra.mxu0 %v183
  %370 = vmatpush.msra.mxu0 %v179
  %371 = vmatpush.msra.mxu0 %v175
  %372 = vmatpush.msra.mxu0 %v171
  %373 = vmatpush.msra.mxu0 %v167
  %374 = vmatmul.f32.gmra.mxu0 %v307
  %v375 = vpop.f32.mrf.mxu0
  %v376 = vadd.f32 %v334, %v375
  %377 = vmatmul.f32.gmra.mxu0 %v308
  %v378 = vpop.f32.mrf.mxu0
  %v379 = vadd.f32 %v334, %v378
  %380 = vdwg.mxu0
  %vm383 = vcmask 1044480
  %v384 = vrot.slane %v353, 3
  %v385 = vrot.slane %v356, 3
  %v386 = vsel %vm383, %v384, %v385
  %vm390 = vcmask 1041408
  %v391 = vrot.slane %v353, 6
  %v392 = vrot.slane %v356, 6
  %v393 = vsel %vm390, %v391, %v392
  %vm396 = vcmask 1046528
  %v397 = vrot.slane %v353, 1
  %v398 = vrot.slane %v356, 1
  %v399 = vsel %vm396, %v397, %v398
  %vm403 = vcmask 1043456
  %v404 = vrot.slane %v353, 4
  %v405 = vrot.slane %v356, 4
  %v406 = vsel %vm403, %v404, %v405
  %vm410 = vcmask 1040384
  %v411 = vrot.slane %v353, 7
  %v412 = vrot.slane %v356, 7
  %v413 = vsel %vm410, %v411, %v412
  %vm416 = vcmask 1045504
  %v417 = vrot.slane %v353, 2
  %v418 = vrot.slane %v356, 2
  %v419 = vsel %vm416, %v417, %v418
  %vm423 = vcmask 1042432
  %v424 = vrot.slane %v353, 5
  %v425 = vrot.slane %v356, 5
  %v426 = vsel %vm423, %v424, %v425
  %v429 = vsel %vm383, %v356, %v384
  %v430 = vsel %vm390, %v385, %v391
  %v431 = vsel %vm396, %v393, %v397
  %v432 = vsel %vm403, %v398, %v404
  %v433 = vsel %vm410, %v405, %v411
  %v434 = vsel %vm416, %v413, %v417
  %v435 = vsel %vm423, %v418, %v424
  %v436 = vmul.f32 %v353, %v233
  %v437 = vmul.f32 %v429, %v234
  %v438 = vmul.f32 %v386, %v235
  %v439 = vmul.f32 %v430, %v236
  %v440 = vmul.f32 %v431, %v237
  %v441 = vmul.f32 %v399, %v238
  %v442 = vmul.f32 %v432, %v239
  %v443 = vmul.f32 %v406, %v240
  %v444 = vmul.f32 %v433, %v241
  %v445 = vmul.f32 %v434, %v242
  %v446 = vmul.f32 %v419, %v243
  %v447 = vmul.f32 %v435, %v244
  %v448 = vmul.f32 %v426, %v245
  %v449 = vmul.f32 %v353, %v246
  %v450 = vmul.f32 %v429, %v247
  %v451 = vmul.f32 %v386, %v248
  %v452 = vmul.f32 %v430, %v249
  %v453 = vmul.f32 %v431, %v250
  %v454 = vmul.f32 %v399, %v251
  %v455 = vmul.f32 %v432, %v252
  %v456 = vmul.f32 %v406, %v253
  %v457 = vmul.f32 %v433, %v254
  %v458 = vmul.f32 %v434, %v255
  %v459 = vmul.f32 %v419, %v256
  %v460 = vmul.f32 %v435, %v257
  %v461 = vmul.f32 %v426, %v258
  %v464 = vrot.slane %v376, 3
  %v465 = vrot.slane %v379, 3
  %v466 = vsel %vm383, %v464, %v465
  %v470 = vrot.slane %v376, 6
  %v471 = vrot.slane %v379, 6
  %v472 = vsel %vm390, %v470, %v471
  %v475 = vrot.slane %v376, 1
  %v476 = vrot.slane %v379, 1
  %v477 = vsel %vm396, %v475, %v476
  %v481 = vrot.slane %v376, 4
  %v482 = vrot.slane %v379, 4
  %v483 = vsel %vm403, %v481, %v482
  %v487 = vrot.slane %v376, 7
  %v488 = vrot.slane %v379, 7
  %v489 = vsel %vm410, %v487, %v488
  %v492 = vrot.slane %v376, 2
  %v493 = vrot.slane %v379, 2
  %v494 = vsel %vm416, %v492, %v493
  %v498 = vrot.slane %v376, 5
  %v499 = vrot.slane %v379, 5
  %v500 = vsel %vm423, %v498, %v499
  %v503 = vsel %vm383, %v379, %v464
  %v504 = vsel %vm390, %v465, %v470
  %v505 = vsel %vm396, %v472, %v475
  %v506 = vsel %vm403, %v476, %v481
  %v507 = vsel %vm410, %v482, %v487
  %v508 = vsel %vm416, %v489, %v492
  %v509 = vsel %vm423, %v493, %v498
  %v510 = vmul.f32 %v376, %v233
  %v511 = vmul.f32 %v503, %v234
  %v512 = vmul.f32 %v466, %v235
  %v513 = vmul.f32 %v504, %v236
  %v514 = vmul.f32 %v505, %v237
  %v515 = vmul.f32 %v477, %v238
  %v516 = vmul.f32 %v506, %v239
  %v517 = vmul.f32 %v483, %v240
  %v518 = vmul.f32 %v507, %v241
  %v519 = vmul.f32 %v508, %v242
  %v520 = vmul.f32 %v494, %v243
  %v521 = vmul.f32 %v509, %v244
  %v522 = vmul.f32 %v500, %v245
  %v523 = vmul.f32 %v376, %v246
  %v524 = vmul.f32 %v503, %v247
  %v525 = vmul.f32 %v466, %v248
  %v526 = vmul.f32 %v504, %v249
  %v527 = vmul.f32 %v505, %v250
  %v528 = vmul.f32 %v477, %v251
  %v529 = vmul.f32 %v506, %v252
  %v530 = vmul.f32 %v483, %v253
  %v531 = vmul.f32 %v507, %v254
  %v532 = vmul.f32 %v508, %v255
  %v533 = vmul.f32 %v494, %v256
  %v534 = vmul.f32 %v509, %v257
  %v535 = vmul.f32 %v500, %v258
  %536 = vmatpush.xpose.msra.mxu0 %v451
  %537 = vmatpush.xpose.msra.mxu0 %v450
  %538 = vmatpush.xpose.msra.mxu0 %v449
  %539 = vmatpush.xpose.msra.mxu0 %v448
  %540 = vmatpush.xpose.msra.mxu0 %v447
  %541 = vmatpush.xpose.msra.mxu0 %v446
  %542 = vmatpush.xpose.msra.mxu0 %v445
  %543 = vmatpush.xpose.msra.mxu0 %v444
  %544 = vmatpush.xpose.msra.mxu0 %v443
  %545 = vmatpush.xpose.msra.mxu0 %v442
  %546 = vmatpush.xpose.msra.mxu0 %v441
  %547 = vmatpush.xpose.msra.mxu0 %v440
  %548 = vmatpush.xpose.msra.mxu0 %v439
  %549 = vmatpush.xpose.msra.mxu0 %v438
  %550 = vmatpush.xpose.msra.mxu0 %v437
  %551 = vmatpush.xpose.msra.mxu0 %v436
  %552 = vmatmul.f32.gmra.mxu0 %v328
  %v553 = vpop.f32.mrf.mxu0
  %v554 = vadd.f32 0.0, %v553
  %555 = vmatmul.f32.gmra.mxu0 %v331
  %v556 = vpop.f32.mrf.mxu0
  %v557 = vadd.f32 0.0, %v556
  %558 = vdwg.mxu0
  %559 = vmatpush.xpose.msra.mxu0 0.0
  %560 = vmatpush.xpose.msra.mxu0 0.0
  %561 = vmatpush.xpose.msra.mxu0 0.0
  %562 = vmatpush.xpose.msra.mxu0 0.0
  %563 = vmatpush.xpose.msra.mxu0 0.0
  %564 = vmatpush.xpose.msra.mxu0 0.0
  %565 = vmatpush.xpose.msra.mxu0 %v461
  %566 = vmatpush.xpose.msra.mxu0 %v460
  %567 = vmatpush.xpose.msra.mxu0 %v459
  %568 = vmatpush.xpose.msra.mxu0 %v458
  %569 = vmatpush.xpose.msra.mxu0 %v457
  %570 = vmatpush.xpose.msra.mxu0 %v456
  %571 = vmatpush.xpose.msra.mxu0 %v455
  %572 = vmatpush.xpose.msra.mxu0 %v454
  %573 = vmatpush.xpose.msra.mxu0 %v453
  %574 = vmatpush.xpose.msra.mxu0 %v452
  %575 = vmatmul.f32.gmra.mxu0 %v328
  %v576 = vpop.f32.mrf.mxu0
  %v577 = vadd.f32 0.0, %v576
  %578 = vmatmul.f32.gmra.mxu0 %v331
  %v579 = vpop.f32.mrf.mxu0
  %v580 = vadd.f32 0.0, %v579
  %581 = vdwg.mxu0
  %vm582 = vcmask 654336
  %v583 = vsel %vm582, %v577, -inf
  %v584 = vmax.f32 %v554, %v583
  %585 = vmax.xlane.f32.xlu0 %v584
  %v586 = vpop.xlane.xlu0 %585
  %v587 = vsel %vm383, %v557, -inf
  %vm588 = vcmask 651264
  %v589 = vsel %vm588, %v580, -inf
  %v590 = vmax.f32 %v587, %v589
  %591 = vmax.xlane.f32.xlu0 %v590
  %v592 = vpop.xlane.xlu0 %591
  %v593 = vsub.f32 %v554, %v586
  %v594 = vsub.f32 %v577, %v586
  %v595 = vsub.f32 %v557, %v592
  %v596 = vsub.f32 %v580, %v592
  %v597 = vmul.f32 %v593, 1.442695
  %v598 = vpow.pop %v597
  %v599 = vmul.f32 %v594, 1.442695
  %v600 = vpow.pop %v599
  %v601 = vmul.f32 %v595, 1.442695
  %v602 = vpow.pop %v601
  %v603 = vmul.f32 %v596, 1.442695
  %v604 = vpow.pop %v603
  %v606 = vsel %vm582, %v600, 0
  %v609 = vsel %vm582, %v604, 0
  %611 = vmatpush.msra.mxu0 %v274
  %612 = vmatpush.msra.mxu0 %v273
  %613 = vmatpush.msra.mxu0 %v272
  %614 = vmatpush.msra.mxu0 %v271
  %615 = vmatpush.msra.mxu0 %v270
  %616 = vmatpush.msra.mxu0 %v269
  %617 = vmatpush.msra.mxu0 %v268
  %618 = vmatpush.msra.mxu0 %v267
  %619 = vmatpush.msra.mxu0 %v266
  %620 = vmatpush.msra.mxu0 %v265
  %621 = vmatpush.msra.mxu0 %v264
  %622 = vmatpush.msra.mxu0 %v263
  %623 = vmatpush.msra.mxu0 %v262
  %624 = vmatpush.msra.mxu0 %v261
  %625 = vmatpush.msra.mxu0 %v260
  %626 = vmatpush.msra.mxu0 %v259
  %627 = vmatmul.f32.gmra.mxu0 %v598
  %v628 = vpop.f32.mrf.mxu0
  %v629 = vadd.f32 0.0, %v628
  %630 = vmatmul.f32.gmra.mxu0 %v602
  %v631 = vpop.f32.mrf.mxu0
  %v632 = vadd.f32 0.0, %v631
  %633 = vdwg.mxu0
  %634 = vmatpush.msra.mxu0 0.0
  %635 = vmatpush.msra.mxu0 0.0
  %636 = vmatpush.msra.mxu0 0.0
  %637 = vmatpush.msra.mxu0 0.0
  %638 = vmatpush.msra.mxu0 0.0
  %639 = vmatpush.msra.mxu0 0.0
  %640 = vmatpush.msra.mxu0 %v284
  %641 = vmatpush.msra.mxu0 %v283
  %642 = vmatpush.msra.mxu0 %v282
  %643 = vmatpush.msra.mxu0 %v281
  %644 = vmatpush.msra.mxu0 %v280
  %645 = vmatpush.msra.mxu0 %v279
  %646 = vmatpush.msra.mxu0 %v278
  %647 = vmatpush.msra.mxu0 %v277
  %648 = vmatpush.msra.mxu0 %v276
  %649 = vmatpush.msra.mxu0 %v275
  %650 = vmatmul.f32.gmra.mxu0 %v606
  %v651 = vpop.f32.mrf.mxu0
  %v652 = vadd.f32 %v629, %v651
  %653 = vmatmul.f32.gmra.mxu0 %v609
  %v654 = vpop.f32.mrf.mxu0
  %v655 = vadd.f32 %v632, %v654
  %656 = vdwg.mxu0
  %657 = vmatpush.msra.mxu0 %v525
  %658 = vmatpush.msra.mxu0 %v524
  %659 = vmatpush.msra.mxu0 %v523
  %660 = vmatpush.msra.mxu0 %v522
  %661 = vmatpush.msra.mxu0 %v521
  %662 = vmatpush.msra.mxu0 %v520
  %663 = vmatpush.msra.mxu0 %v519
  %664 = vmatpush.msra.mxu0 %v518
  %665 = vmatpush.msra.mxu0 %v517
  %666 = vmatpush.msra.mxu0 %v516
  %667 = vmatpush.msra.mxu0 %v515
  %668 = vmatpush.msra.mxu0 %v514
  %669 = vmatpush.msra.mxu0 %v513
  %670 = vmatpush.msra.mxu0 %v512
  %671 = vmatpush.msra.mxu0 %v511
  %672 = vmatpush.msra.mxu0 %v510
  %673 = vmatmul.f32.gmra.mxu0 %v598
  %v674 = vpop.f32.mrf.mxu0
  %v675 = vadd.f32 0.0, %v674
  %676 = vmatmul.f32.gmra.mxu0 %v602
  %v677 = vpop.f32.mrf.mxu0
  %v678 = vadd.f32 0.0, %v677
  %679 = vdwg.mxu0
  %680 = vmatpush.msra.mxu0 0.0
  %681 = vmatpush.msra.mxu0 0.0
  %682 = vmatpush.msra.mxu0 0.0
  %683 = vmatpush.msra.mxu0 0.0
  %684 = vmatpush.msra.mxu0 0.0
  %685 = vmatpush.msra.mxu0 0.0
  %686 = vmatpush.msra.mxu0 %v535
  %687 = vmatpush.msra.mxu0 %v534
  %688 = vmatpush.msra.mxu0 %v533
  %689 = vmatpush.msra.mxu0 %v532
  %690 = vmatpush.msra.mxu0 %v531
  %691 = vmatpush.msra.mxu0 %v530
  %692 = vmatpush.msra.mxu0 %v529
  %693 = vmatpush.msra.mxu0 %v528
  %694 = vmatpush.msra.mxu0 %v527
  %695 = vmatpush.msra.mxu0 %v526
  %696 = vmatmul.f32.gmra.mxu0 %v606
  %v697 = vpop.f32.mrf.mxu0
  %v698 = vadd.f32 %v675, %v697
  %699 = vmatmul.f32.gmra.mxu0 %v609
  %v700 = vpop.f32.mrf.mxu0
  %v701 = vadd.f32 %v678, %v700
  %702 = vdwg.mxu0
  %vm703 = vcmask 130048
  %v705 = vsel %vm703, %v652, 0
  %v708 = vsel %vm703, %v655, 0
  %710 = vmatpush.msra.mxu0 0.0
  %711 = vmatpush.msra.mxu0 0.0
  %712 = vmatpush.msra.mxu0 0.0
  %713 = vmatpush.msra.mxu0 0.0
  %714 = vmatpush.msra.mxu0 0.0
  %715 = vmatpush.msra.mxu0 0.0
  %716 = vmatpush.msra.mxu0 0.0
  %717 = vmatpush.msra.mxu0 0.0
  %718 = vmatpush.msra.mxu0 0.0
  %719 = vmatpush.msra.mxu0 0.0
  %720 = vmatpush.msra.mxu0 0.0
  %721 = vmatpush.msra.mxu0 0.0
  %722 = vmatpush.msra.mxu0 0.0
  %723 = vmatpush.msra.mxu0 0.0
  %724 = vmatpush.msra.mxu0 %v232
  %725 = vmatpush.msra.mxu0 %v231
  %726 = vmatmul.f32.gmra.mxu0 %v705
  %v727 = vpop.f32.mrf.mxu0
  %v728 = vadd.f32 0.0, %v727
  %729 = vmatmul.f32.gmra.mxu0 %v708
  %v730 = vpop.f32.mrf.mxu0
  %v731 = vadd.f32 0.0, %v730
  %732 = vdwg.mxu0
  %v733 = vrcp.pop %v728
  %v734 = vmul.f32 %v728, %v733
  %v735 = vsub.f32 1.0, %v734
  %v736 = vmul.f32 %v733, %v735
  %v737 = vadd.f32 %v733, %v736
  %vm738 = vweird.f32 %v728
  %vm739 = vweird.f32 %v733
  %vm740 = vmor %vm738, %vm739
  %v741 = vsel %vm740, %v733, %v737
  %v742 = vand.u32 2147483647, %v728
  %vm743 = vcmp.eq.f32.partialorder %v742, 8.507059e+37
  %v744 = vand.u32 %v728, 2147483648
  %v745 = vor.u32 1.1754944e-38, %v744
  %v746 = vsel %vm743, %v745, %v741
  %v747 = vmul.f32 %v698, %v746
  %v748 = vrcp.pop %v731
  %v749 = vmul.f32 %v731, %v748
  %v750 = vsub.f32 1.0, %v749
  %v751 = vmul.f32 %v748, %v750
  %v752 = vadd.f32 %v748, %v751
  %vm753 = vweird.f32 %v731
  %vm754 = vweird.f32 %v748
  %vm755 = vmor %vm753, %vm754
  %v756 = vsel %vm755, %v748, %v752
  %v757 = vand.u32 2147483647, %v731
  %vm758 = vcmp.eq.f32.partialorder %v757, 8.507059e+37
  %v759 = vand.u32 %v731, 2147483648
  %v760 = vor.u32 1.1754944e-38, %v759
  %v761 = vsel %vm758, %v760, %v756
  %v762 = vmul.f32 %v701, %v761
  %v763 = vperm.slane %v229, 3
  %764 = vmatpush.msra.mxu0 %v228
  %765 = vmatpush.msra.mxu0 %v224
  %766 = vmatpush.msra.mxu0 %v220
  %767 = vmatpush.msra.mxu0 %v216
  %768 = vmatpush.msra.mxu0 %v212
  %769 = vmatpush.msra.mxu0 %v208
  %770 = vmatpush.msra.mxu0 %v204
  %771 = vmatpush.msra.mxu0 %v200
  %772 = vmatpush.msra.mxu0 %v196
  %773 = vmatpush.msra.mxu0 %v192
  %774 = vmatpush.msra.mxu0 %v188
  %775 = vmatpush.msra.mxu0 %v184
  %776 = vmatpush.msra.mxu0 %v180
  %777 = vmatpush.msra.mxu0 %v176
  %778 = vmatpush.msra.mxu0 %v172
  %779 = vmatpush.msra.mxu0 %v168
  %780 = vmatmul.f32.gmra.mxu0 %v747
  %v781 = vpop.f32.mrf.mxu0
  %v782 = vadd.f32 %v763, %v781
  %783 = vmatmul.f32.gmra.mxu0 %v762
  %v784 = vpop.f32.mrf.mxu0
  %v785 = vadd.f32 %v763, %v784
  %786 = vdwg.mxu0
  %v787 = vadd.f32 %v782, %v305
  %v788 = vadd.f32 %v785, %v306
  %v789 = vmul.f32 %v787, %v787
  %v790 = vmul.f32 %v788, %v788
  %v793 = vrot.slane %v789, 3
  %v794 = vrot.slane %v790, 3
  %v795 = vsel %vm383, %v793, %v794
  %v799 = vsel %vm383, %v788, %v793
  %800 = vmatpush.msra.mxu0 %v300
  %801 = vmatpush.msra.mxu0 %v299
  %802 = vmatpush.msra.mxu0 %v298
  %803 = vmatpush.msra.mxu0 %v297
  %804 = vmatpush.msra.mxu0 %v296
  %805 = vmatpush.msra.mxu0 %v295
  %806 = vmatpush.msra.mxu0 %v294
  %807 = vmatpush.msra.mxu0 %v293
  %808 = vmatpush.msra.mxu0 %v292
  %809 = vmatpush.msra.mxu0 %v291
  %810 = vmatpush.msra.mxu0 %v290
  %811 = vmatpush.msra.mxu0 %v289
  %812 = vmatpush.msra.mxu0 %v288
  %813 = vmatpush.msra.mxu0 %v287
  %814 = vmatpush.msra.mxu0 %v286
  %815 = vmatpush.msra.mxu0 %v285
  %816 = vmatmul.f32.gmra.mxu0 %v787
  %v817 = vpop.f32.mrf.mxu0
  %v818 = vadd.f32 0.0, %v817
  %819 = vmatmul.f32.gmra.mxu0 %v799
  %v820 = vpop.f32.mrf.mxu0
  %v821 = vadd.f32 0.0, %v820
  %822 = vmatmul.f32.gmra.mxu0 %v795
  %v823 = vpop.f32.mrf.mxu0
  %v824 = vadd.f32 0.0, %v823
  %825 = vmatmul.f32.gmra.mxu0 %v794
  %v826 = vpop.f32.mrf.mxu0
  %v827 = vadd.f32 0.0, %v826
  %828 = vdwg.mxu0
  %v829 = vmul.f32 %v818, %v818
  %v830 = vmul.f32 %v821, %v821
  %v833 = vrot.slane %v829, 3
  %v834 = vrot.slane %v830, 3
  %v835 = vsel %vm383, %v833, %v834
  %v839 = vsub.f32 %v821, %v833
  %v840 = vsub.f32 %v824, %v835
  %v841 = vsub.f32 %v827, %v834
  %v842 = vsel %vm383, %v821, %v839
  %vm843 = vcmask 64512
  %v845 = vsel %vm843, %v818, 0
  %v848 = vsel %vm843, %v842, 0
  %v851 = vsel %vm843, %v840, 0
  %v854 = vsel %vm843, %v841, 0
  %856 = vmatpush.msra.mxu0 0.0
  %857 = vmatpush.msra.mxu0 0.0
  %858 = vmatpush.msra.mxu0 0.0
  %859 = vmatpush.msra.mxu0 0.0
  %860 = vmatpush.msra.mxu0 0.0
  %861 = vmatpush.msra.mxu0 0.0
  %862 = vmatpush.msra.mxu0 0.0
  %863 = vmatpush.msra.mxu0 0.0
  %864 = vmatpush.msra.mxu0 0.0
  %865 = vmatpush.msra.mxu0 0.0
  %866 = vmatpush.msra.mxu0 0.0
  %867 = vmatpush.msra.mxu0 0.0
  %868 = vmatpush.msra.mxu0 0.0
  %869 = vmatpush.msra.mxu0 0.0
  %870 = vmatpush.msra.mxu0 0.0
  %871 = vmatpush.msra.mxu0 %v230
  %872 = vmatmul.f32.gmra.mxu0 %v845
  %v873 = vpop.f32.mrf.mxu0
  %v874 = vadd.f32 0.0, %v873
  %875 = vmatmul.f32.gmra.mxu0 %v848
  %v876 = vpop.f32.mrf.mxu0
  %v877 = vadd.f32 0.0, %v876
  %878 = vmatmul.f32.gmra.mxu0 %v851
  %v879 = vpop.f32.mrf.mxu0
  %v880 = vadd.f32 0.0, %v879
  %881 = vmatmul.f32.gmra.mxu0 %v854
  %v882 = vpop.f32.mrf.mxu0
  %v883 = vadd.f32 0.0, %v882
  %884 = vdwg.mxu0
  %v885 = vsub.f32 %v787, %v874
  %v886 = vsub.f32 %v788, %v877
  %v887 = vadd.f32 %v877, 1e-05
  %v888 = vadd.f32 %v880, 1e-05
  %v889 = vadd.f32 %v883, 1e-05
  %v890 = vrsqrt.pop %v887
  %v891 = vmul.f32 %v890, %v887
  %v892 = vmul.f32 %v891, %v890
  %v893 = vmul.f32 0.5, %v892
  %v894 = vsub.f32 1.5, %v893
  %v895 = vmul.f32 %v890, %v894
  %vm896 = vweird.f32 %v887
  %vm897 = vweird.f32 %v890
  %vm898 = vmor %vm896, %vm897
  %v899 = vsel %vm898, %v890, %v895
  %v900 = vrsqrt.pop %v888
  %v901 = vmul.f32 %v900, %v888
  %v902 = vmul.f32 %v901, %v900
  %v903 = vmul.f32 0.5, %v902
  %v904 = vsub.f32 1.5, %v903
  %v905 = vmul.f32 %v900, %v904
  %vm906 = vweird.f32 %v888
  %vm907 = vweird.f32 %v900
  %vm908 = vmor %vm906, %vm907
  %v909 = vsel %vm908, %v900, %v905
  %v910 = vrsqrt.pop %v889
  %v911 = vmul.f32 %v910, %v889
  %v912 = vmul.f32 %v911, %v910
  %v913 = vmul.f32 0.5, %v912
  %v914 = vsub.f32 1.5, %v913
  %v915 = vmul.f32 %v910, %v914
  %vm916 = vweird.f32 %v889
  %vm917 = vweird.f32 %v910
  %vm918 = vmor %vm916, %vm917
  %v919 = vsel %vm918, %v910, %v915
  %v923 = vrot.slane %v899, 5
  %v924 = vrot.slane %v909, 5
  %v925 = vsel %vm423, %v923, %v924
  %v926 = vrot.slane %v919, 5
  %v927 = vsel %vm423, %v924, %v926
  %v930 = vmul.f32 %v885, %v925
  %v931 = vmul.f32 %v886, %v927
  %v932 = vperm.slane %v229, 4
  %v933 = vmul.f32 %v930, %v932
  %v934 = vmul.f32 %v931, %v932
  %v935 = vperm.slane %v229, 5
  %v936 = vadd.f32 %v933, %v935
  %v937 = vadd.f32 %v934, %v935
  %s938 = scalar_lea.vmem %s0, 32
  %v939 = vld [vmem:[%s938] sm:$0xff]
  %v940 = vld [vmem:[%s938 + $0x8] sm:$0x1f]
  %941 = vmatpush.msra.mxu0 %v225
  %942 = vmatpush.msra.mxu0 %v221
  %943 = vmatpush.msra.mxu0 %v217
  %944 = vmatpush.msra.mxu0 %v213
  %945 = vmatpush.msra.mxu0 %v209
  %946 = vmatpush.msra.mxu0 %v205
  %947 = vmatpush.msra.mxu0 %v201
  %948 = vmatpush.msra.mxu0 %v197
  %949 = vmatpush.msra.mxu0 %v193
  %950 = vmatpush.msra.mxu0 %v189
  %951 = vmatpush.msra.mxu0 %v185
  %952 = vmatpush.msra.mxu0 %v181
  %953 = vmatpush.msra.mxu0 %v177
  %954 = vmatpush.msra.mxu0 %v173
  %955 = vmatpush.msra.mxu0 %v169
  %956 = vmatpush.msra.mxu0 %v165
  %957 = vmatmul.f32.gmra.mxu0 %v939
  %v958 = vpop.f32.mrf.mxu0
  %v959 = vadd.f32 %v309, %v958
  %960 = vmatmul.f32.gmra.mxu0 %v940
  %v961 = vpop.f32.mrf.mxu0
  %v962 = vadd.f32 %v309, %v961
  %963 = vdwg.mxu0
  %964 = vmatpush.msra.mxu0 %v226
  %965 = vmatpush.msra.mxu0 %v222
  %966 = vmatpush.msra.mxu0 %v218
  %967 = vmatpush.msra.mxu0 %v214
  %968 = vmatpush.msra.mxu0 %v210
  %969 = vmatpush.msra.mxu0 %v206
  %970 = vmatpush.msra.mxu0 %v202
  %971 = vmatpush.msra.mxu0 %v198
  %972 = vmatpush.msra.mxu0 %v194
  %973 = vmatpush.msra.mxu0 %v190
  %974 = vmatpush.msra.mxu0 %v186
  %975 = vmatpush.msra.mxu0 %v182
  %976 = vmatpush.msra.mxu0 %v178
  %977 = vmatpush.msra.mxu0 %v174
  %978 = vmatpush.msra.mxu0 %v170
  %979 = vmatpush.msra.mxu0 %v166
  %980 = vmatmul.f32.gmra.mxu0 %v936
  %v981 = vpop.f32.mrf.mxu0
  %v982 = vadd.f32 %v333, %v981
  %983 = vmatmul.f32.gmra.mxu0 %v937
  %v984 = vpop.f32.mrf.mxu0
  %v985 = vadd.f32 %v333, %v984
  %986 = vdwg.mxu0
  %987 = vmatpush.msra.mxu0 %v227
  %988 = vmatpush.msra.mxu0 %v223
  %989 = vmatpush.msra.mxu0 %v219
  %990 = vmatpush.msra.mxu0 %v215
  %991 = vmatpush.msra.mxu0 %v211
  %992 = vmatpush.msra.mxu0 %v207
  %993 = vmatpush.msra.mxu0 %v203
  %994 = vmatpush.msra.mxu0 %v199
  %995 = vmatpush.msra.mxu0 %v195
  %996 = vmatpush.msra.mxu0 %v191
  %997 = vmatpush.msra.mxu0 %v187
  %998 = vmatpush.msra.mxu0 %v183
  %999 = vmatpush.msra.mxu0 %v179
  %1000 = vmatpush.msra.mxu0 %v175
  %1001 = vmatpush.msra.mxu0 %v171
  %1002 = vmatpush.msra.mxu0 %v167
  %1003 = vmatmul.f32.gmra.mxu0 %v936
  %v1004 = vpop.f32.mrf.mxu0
  %v1005 = vadd.f32 %v334, %v1004
  %1006 = vmatmul.f32.gmra.mxu0 %v937
  %v1007 = vpop.f32.mrf.mxu0
  %v1008 = vadd.f32 %v334, %v1007
  %1009 = vdwg.mxu0
  %v1012 = vrot.slane %v982, 3
  %v1013 = vrot.slane %v985, 3
  %v1014 = vsel %vm383, %v1012, %v1013
  %v1018 = vrot.slane %v982, 6
  %v1019 = vrot.slane %v985, 6
  %v1020 = vsel %vm390, %v1018, %v1019
  %v1023 = vrot.slane %v982, 1
  %v1024 = vrot.slane %v985, 1
  %v1025 = vsel %vm396, %v1023, %v1024
  %v1029 = vrot.slane %v982, 4
  %v1030 = vrot.slane %v985, 4
  %v1031 = vsel %vm403, %v1029, %v1030
  %v1035 = vrot.slane %v982, 7
  %v1036 = vrot.slane %v985, 7
  %v1037 = vsel %vm410, %v1035, %v1036
  %v1040 = vrot.slane %v982, 2
  %v1041 = vrot.slane %v985, 2
  %v1042 = vsel %vm416, %v1040, %v1041
  %v1046 = vrot.slane %v982, 5
  %v1047 = vrot.slane %v985, 5
  %v1048 = vsel %vm423, %v1046, %v1047
  %v1051 = vsel %vm383, %v985, %v1012
  %v1052 = vsel %vm390, %v1013, %v1018
  %v1053 = vsel %vm396, %v1020, %v1023
  %v1054 = vsel %vm403, %v1024, %v1029
  %v1055 = vsel %vm410, %v1030, %v1035
  %v1056 = vsel %vm416, %v1037, %v1040
  %v1057 = vsel %vm423, %v1041, %v1046
  %v1058 = vmul.f32 %v982, %v233
  %v1059 = vmul.f32 %v1051, %v234
  %v1060 = vmul.f32 %v1014, %v235
  %v1061 = vmul.f32 %v1052, %v236
  %v1062 = vmul.f32 %v1053, %v237
  %v1063 = vmul.f32 %v1025, %v238
  %v1064 = vmul.f32 %v1054, %v239
  %v1065 = vmul.f32 %v1031, %v240
  %v1066 = vmul.f32 %v1055, %v241
  %v1067 = vmul.f32 %v1056, %v242
  %v1068 = vmul.f32 %v1042, %v243
  %v1069 = vmul.f32 %v1057, %v244
  %v1070 = vmul.f32 %v1048, %v245
  %v1071 = vmul.f32 %v982, %v246
  %v1072 = vmul.f32 %v1051, %v247
  %v1073 = vmul.f32 %v1014, %v248
  %v1074 = vmul.f32 %v1052, %v249
  %v1075 = vmul.f32 %v1053, %v250
  %v1076 = vmul.f32 %v1025, %v251
  %v1077 = vmul.f32 %v1054, %v252
  %v1078 = vmul.f32 %v1031, %v253
  %v1079 = vmul.f32 %v1055, %v254
  %v1080 = vmul.f32 %v1056, %v255
  %v1081 = vmul.f32 %v1042, %v256
  %v1082 = vmul.f32 %v1057, %v257
  %v1083 = vmul.f32 %v1048, %v258
  %v1086 = vrot.slane %v1005, 3
  %v1087 = vrot.slane %v1008, 3
  %v1088 = vsel %vm383, %v1086, %v1087
  %v1092 = vrot.slane %v1005, 6
  %v1093 = vrot.slane %v1008, 6
  %v1094 = vsel %vm390, %v1092, %v1093
  %v1097 = vrot.slane %v1005, 1
  %v1098 = vrot.slane %v1008, 1
  %v1099 = vsel %vm396, %v1097, %v1098
  %v1103 = vrot.slane %v1005, 4
  %v1104 = vrot.slane %v1008, 4
  %v1105 = vsel %vm403, %v1103, %v1104
  %v1109 = vrot.slane %v1005, 7
  %v1110 = vrot.slane %v1008, 7
  %v1111 = vsel %vm410, %v1109, %v1110
  %v1114 = vrot.slane %v1005, 2
  %v1115 = vrot.slane %v1008, 2
  %v1116 = vsel %vm416, %v1114, %v1115
  %v1120 = vrot.slane %v1005, 5
  %v1121 = vrot.slane %v1008, 5
  %v1122 = vsel %vm423, %v1120, %v1121
  %v1125 = vsel %vm383, %v1008, %v1086
  %v1126 = vsel %vm390, %v1087, %v1092
  %v1127 = vsel %vm396, %v1094, %v1097
  %v1128 = vsel %vm403, %v1098, %v1103
  %v1129 = vsel %vm410, %v1104, %v1109
  %v1130 = vsel %vm416, %v1111, %v1114
  %v1131 = vsel %vm423, %v1115, %v1120
  %v1132 = vmul.f32 %v1005, %v233
  %v1133 = vmul.f32 %v1125, %v234
  %v1134 = vmul.f32 %v1088, %v235
  %v1135 = vmul.f32 %v1126, %v236
  %v1136 = vmul.f32 %v1127, %v237
  %v1137 = vmul.f32 %v1099, %v238
  %v1138 = vmul.f32 %v1128, %v239
  %v1139 = vmul.f32 %v1105, %v240
  %v1140 = vmul.f32 %v1129, %v241
  %v1141 = vmul.f32 %v1130, %v242
  %v1142 = vmul.f32 %v1116, %v243
  %v1143 = vmul.f32 %v1131, %v244
  %v1144 = vmul.f32 %v1122, %v245
  %v1145 = vmul.f32 %v1005, %v246
  %v1146 = vmul.f32 %v1125, %v247
  %v1147 = vmul.f32 %v1088, %v248
  %v1148 = vmul.f32 %v1126, %v249
  %v1149 = vmul.f32 %v1127, %v250
  %v1150 = vmul.f32 %v1099, %v251
  %v1151 = vmul.f32 %v1128, %v252
  %v1152 = vmul.f32 %v1105, %v253
  %v1153 = vmul.f32 %v1129, %v254
  %v1154 = vmul.f32 %v1130, %v255
  %v1155 = vmul.f32 %v1116, %v256
  %v1156 = vmul.f32 %v1131, %v257
  %v1157 = vmul.f32 %v1122, %v258
  %1158 = vmatpush.xpose.msra.mxu0 %v1073
  %1159 = vmatpush.xpose.msra.mxu0 %v1072
  %1160 = vmatpush.xpose.msra.mxu0 %v1071
  %1161 = vmatpush.xpose.msra.mxu0 %v1070
  %1162 = vmatpush.xpose.msra.mxu0 %v1069
  %1163 = vmatpush.xpose.msra.mxu0 %v1068
  %1164 = vmatpush.xpose.msra.mxu0 %v1067
  %1165 = vmatpush.xpose.msra.mxu0 %v1066
  %1166 = vmatpush.xpose.msra.mxu0 %v1065
  %1167 = vmatpush.xpose.msra.mxu0 %v1064
  %1168 = vmatpush.xpose.msra.mxu0 %v1063
  %1169 = vmatpush.xpose.msra.mxu0 %v1062
  %1170 = vmatpush.xpose.msra.mxu0 %v1061
  %1171 = vmatpush.xpose.msra.mxu0 %v1060
  %1172 = vmatpush.xpose.msra.mxu0 %v1059
  %1173 = vmatpush.xpose.msra.mxu0 %v1058
  %1174 = vmatmul.f32.gmra.mxu0 %v959
  %v1175 = vpop.f32.mrf.mxu0
  %v1176 = vadd.f32 0.0, %v1175
  %1177 = vmatmul.f32.gmra.mxu0 %v962
  %v1178 = vpop.f32.mrf.mxu0
  %v1179 = vadd.f32 0.0, %v1178
  %1180 = vdwg.mxu0
  %1181 = vmatpush.xpose.msra.mxu0 0.0
  %1182 = vmatpush.xpose.msra.mxu0 0.0
  %1183 = vmatpush.xpose.msra.mxu0 0.0
  %1184 = vmatpush.xpose.msra.mxu0 0.0
  %1185 = vmatpush.xpose.msra.mxu0 0.0
  %1186 = vmatpush.xpose.msra.mxu0 0.0
  %1187 = vmatpush.xpose.msra.mxu0 %v1083
  %1188 = vmatpush.xpose.msra.mxu0 %v1082
  %1189 = vmatpush.xpose.msra.mxu0 %v1081
  %1190 = vmatpush.xpose.msra.mxu0 %v1080
  %1191 = vmatpush.xpose.msra.mxu0 %v1079
  %1192 = vmatpush.xpose.msra.mxu0 %v1078
  %1193 = vmatpush.xpose.msra.mxu0 %v1077
  %1194 = vmatpush.xpose.msra.mxu0 %v1076
  %1195 = vmatpush.xpose.msra.mxu0 %v1075
  %1196 = vmatpush.xpose.msra.mxu0 %v1074
  %1197 = vmatmul.f32.gmra.mxu0 %v959
  %v1198 = vpop.f32.mrf.mxu0
  %v1199 = vadd.f32 0.0, %v1198
  %1200 = vmatmul.f32.gmra.mxu0 %v962
  %v1201 = vpop.f32.mrf.mxu0
  %v1202 = vadd.f32 0.0, %v1201
  %1203 = vdwg.mxu0
  %v1204 = vsel %vm582, %v1199, -inf
  %v1205 = vmax.f32 %v1176, %v1204
  %1206 = vmax.xlane.f32.xlu0 %v1205
  %v1207 = vpop.xlane.xlu0 %1206
  %v1208 = vsel %vm383, %v1179, -inf
  %v1209 = vsel %vm588, %v1202, -inf
  %v1210 = vmax.f32 %v1208, %v1209
  %1211 = vmax.xlane.f32.xlu0 %v1210
  %v1212 = vpop.xlane.xlu0 %1211
  %v1213 = vsub.f32 %v1176, %v1207
  %v1214 = vsub.f32 %v1199, %v1207
  %v1215 = vsub.f32 %v1179, %v1212
  %v1216 = vsub.f32 %v1202, %v1212
  %v1217 = vmul.f32 %v1213, 1.442695
  %v1218 = vpow.pop %v1217
  %v1219 = vmul.f32 %v1214, 1.442695
  %v1220 = vpow.pop %v1219
  %v1221 = vmul.f32 %v1215, 1.442695
  %v1222 = vpow.pop %v1221
  %v1223 = vmul.f32 %v1216, 1.442695
  %v1224 = vpow.pop %v1223
  %v1226 = vsel %vm582, %v1220, 0
  %v1229 = vsel %vm582, %v1224, 0
  %1231 = vmatpush.msra.mxu0 %v274
  %1232 = vmatpush.msra.mxu0 %v273
  %1233 = vmatpush.msra.mxu0 %v272
  %1234 = vmatpush.msra.mxu0 %v271
  %1235 = vmatpush.msra.mxu0 %v270
  %1236 = vmatpush.msra.mxu0 %v269
  %1237 = vmatpush.msra.mxu0 %v268
  %1238 = vmatpush.msra.mxu0 %v267
  %1239 = vmatpush.msra.mxu0 %v266
  %1240 = vmatpush.msra.mxu0 %v265
  %1241 = vmatpush.msra.mxu0 %v264
  %1242 = vmatpush.msra.mxu0 %v263
  %1243 = vmatpush.msra.mxu0 %v262
  %1244 = vmatpush.msra.mxu0 %v261
  %1245 = vmatpush.msra.mxu0 %v260
  %1246 = vmatpush.msra.mxu0 %v259
  %1247 = vmatmul.f32.gmra.mxu0 %v1218
  %v1248 = vpop.f32.mrf.mxu0
  %v1249 = vadd.f32 0.0, %v1248
  %1250 = vmatmul.f32.gmra.mxu0 %v1222
  %v1251 = vpop.f32.mrf.mxu0
  %v1252 = vadd.f32 0.0, %v1251
  %1253 = vdwg.mxu0
  %1254 = vmatpush.msra.mxu0 0.0
  %1255 = vmatpush.msra.mxu0 0.0
  %1256 = vmatpush.msra.mxu0 0.0
  %1257 = vmatpush.msra.mxu0 0.0
  %1258 = vmatpush.msra.mxu0 0.0
  %1259 = vmatpush.msra.mxu0 0.0
  %1260 = vmatpush.msra.mxu0 %v284
  %1261 = vmatpush.msra.mxu0 %v283
  %1262 = vmatpush.msra.mxu0 %v282
  %1263 = vmatpush.msra.mxu0 %v281
  %1264 = vmatpush.msra.mxu0 %v280
  %1265 = vmatpush.msra.mxu0 %v279
  %1266 = vmatpush.msra.mxu0 %v278
  %1267 = vmatpush.msra.mxu0 %v277
  %1268 = vmatpush.msra.mxu0 %v276
  %1269 = vmatpush.msra.mxu0 %v275
  %1270 = vmatmul.f32.gmra.mxu0 %v1226
  %v1271 = vpop.f32.mrf.mxu0
  %v1272 = vadd.f32 %v1249, %v1271
  %1273 = vmatmul.f32.gmra.mxu0 %v1229
  %v1274 = vpop.f32.mrf.mxu0
  %v1275 = vadd.f32 %v1252, %v1274
  %1276 = vdwg.mxu0
  %1277 = vmatpush.msra.mxu0 %v1147
  %1278 = vmatpush.msra.mxu0 %v1146
  %1279 = vmatpush.msra.mxu0 %v1145
  %1280 = vmatpush.msra.mxu0 %v1144
  %1281 = vmatpush.msra.mxu0 %v1143
  %1282 = vmatpush.msra.mxu0 %v1142
  %1283 = vmatpush.msra.mxu0 %v1141
  %1284 = vmatpush.msra.mxu0 %v1140
  %1285 = vmatpush.msra.mxu0 %v1139
  %1286 = vmatpush.msra.mxu0 %v1138
  %1287 = vmatpush.msra.mxu0 %v1137
  %1288 = vmatpush.msra.mxu0 %v1136
  %1289 = vmatpush.msra.mxu0 %v1135
  %1290 = vmatpush.msra.mxu0 %v1134
  %1291 = vmatpush.msra.mxu0 %v1133
  %1292 = vmatpush.msra.mxu0 %v1132
  %1293 = vmatmul.f32.gmra.mxu0 %v1218
  %v1294 = vpop.f32.mrf.mxu0
  %v1295 = vadd.f32 0.0, %v1294
  %1296 = vmatmul.f32.gmra.mxu0 %v1222
  %v1297 = vpop.f32.mrf.mxu0
  %v1298 = vadd.f32 0.0, %v1297
  %1299 = vdwg.mxu0
  %1300 = vmatpush.msra.mxu0 0.0
  %1301 = vmatpush.msra.mxu0 0.0
  %1302 = vmatpush.msra.mxu0 0.0
  %1303 = vmatpush.msra.mxu0 0.0
  %1304 = vmatpush.msra.mxu0 0.0
  %1305 = vmatpush.msra.mxu0 0.0
  %1306 = vmatpush.msra.mxu0 %v1157
  %1307 = vmatpush.msra.mxu0 %v1156
  %1308 = vmatpush.msra.mxu0 %v1155
  %1309 = vmatpush.msra.mxu0 %v1154
  %1310 = vmatpush.msra.mxu0 %v1153
  %1311 = vmatpush.msra.mxu0 %v1152
  %1312 = vmatpush.msra.mxu0 %v1151
  %1313 = vmatpush.msra.mxu0 %v1150
  %1314 = vmatpush.msra.mxu0 %v1149
  %1315 = vmatpush.msra.mxu0 %v1148
  %1316 = vmatmul.f32.gmra.mxu0 %v1226
  %v1317 = vpop.f32.mrf.mxu0
  %v1318 = vadd.f32 %v1295, %v1317
  %1319 = vmatmul.f32.gmra.mxu0 %v1229
  %v1320 = vpop.f32.mrf.mxu0
  %v1321 = vadd.f32 %v1298, %v1320
  %1322 = vdwg.mxu0
  %v1324 = vsel %vm703, %v1272, 0
  %v1327 = vsel %vm703, %v1275, 0
  %1329 = vmatpush.msra.mxu0 0.0
  %1330 = vmatpush.msra.mxu0 0.0
  %1331 = vmatpush.msra.mxu0 0.0
  %1332 = vmatpush.msra.mxu0 0.0
  %1333 = vmatpush.msra.mxu0 0.0
  %1334 = vmatpush.msra.mxu0 0.0
  %1335 = vmatpush.msra.mxu0 0.0
  %1336 = vmatpush.msra.mxu0 0.0
  %1337 = vmatpush.msra.mxu0 0.0
  %1338 = vmatpush.msra.mxu0 0.0
  %1339 = vmatpush.msra.mxu0 0.0
  %1340 = vmatpush.msra.mxu0 0.0
  %1341 = vmatpush.msra.mxu0 0.0
  %1342 = vmatpush.msra.mxu0 0.0
  %1343 = vmatpush.msra.mxu0 %v232
  %1344 = vmatpush.msra.mxu0 %v231
  %1345 = vmatmul.f32.gmra.mxu0 %v1324
  %v1346 = vpop.f32.mrf.mxu0
  %v1347 = vadd.f32 0.0, %v1346
  %1348 = vmatmul.f32.gmra.mxu0 %v1327
  %v1349 = vpop.f32.mrf.mxu0
  %v1350 = vadd.f32 0.0, %v1349
  %1351 = vdwg.mxu0
  %v1352 = vrcp.pop %v1347
  %v1353 = vmul.f32 %v1347, %v1352
  %v1354 = vsub.f32 1.0, %v1353
  %v1355 = vmul.f32 %v1352, %v1354
  %v1356 = vadd.f32 %v1352, %v1355
  %vm1357 = vweird.f32 %v1347
  %vm1358 = vweird.f32 %v1352
  %vm1359 = vmor %vm1357, %vm1358
  %v1360 = vsel %vm1359, %v1352, %v1356
  %v1361 = vand.u32 2147483647, %v1347
  %vm1362 = vcmp.eq.f32.partialorder %v1361, 8.507059e+37
  %v1363 = vand.u32 %v1347, 2147483648
  %v1364 = vor.u32 1.1754944e-38, %v1363
  %v1365 = vsel %vm1362, %v1364, %v1360
  %v1366 = vmul.f32 %v1318, %v1365
  %v1367 = vrcp.pop %v1350
  %v1368 = vmul.f32 %v1350, %v1367
  %v1369 = vsub.f32 1.0, %v1368
  %v1370 = vmul.f32 %v1367, %v1369
  %v1371 = vadd.f32 %v1367, %v1370
  %vm1372 = vweird.f32 %v1350
  %vm1373 = vweird.f32 %v1367
  %vm1374 = vmor %vm1372, %vm1373
  %v1375 = vsel %vm1374, %v1367, %v1371
  %v1376 = vand.u32 2147483647, %v1350
  %vm1377 = vcmp.eq.f32.partialorder %v1376, 8.507059e+37
  %v1378 = vand.u32 %v1350, 2147483648
  %v1379 = vor.u32 1.1754944e-38, %v1378
  %v1380 = vsel %vm1377, %v1379, %v1375
  %v1381 = vmul.f32 %v1321, %v1380
  %1382 = vmatpush.msra.mxu0 %v228
  %1383 = vmatpush.msra.mxu0 %v224
  %1384 = vmatpush.msra.mxu0 %v220
  %1385 = vmatpush.msra.mxu0 %v216
  %1386 = vmatpush.msra.mxu0 %v212
  %1387 = vmatpush.msra.mxu0 %v208
  %1388 = vmatpush.msra.mxu0 %v204
  %1389 = vmatpush.msra.mxu0 %v200
  %1390 = vmatpush.msra.mxu0 %v196
  %1391 = vmatpush.msra.mxu0 %v192
  %1392 = vmatpush.msra.mxu0 %v188
  %1393 = vmatpush.msra.mxu0 %v184
  %1394 = vmatpush.msra.mxu0 %v180
  %1395 = vmatpush.msra.mxu0 %v176
  %1396 = vmatpush.msra.mxu0 %v172
  %1397 = vmatpush.msra.mxu0 %v168
  %1398 = vmatmul.f32.gmra.mxu0 %v1366
  %v1399 = vpop.f32.mrf.mxu0
  %v1400 = vadd.f32 %v763, %v1399
  %1401 = vmatmul.f32.gmra.mxu0 %v1381
  %v1402 = vpop.f32.mrf.mxu0
  %v1403 = vadd.f32 %v763, %v1402
  %1404 = vdwg.mxu0
  %v1405 = vadd.f32 %v1400, %v939
  %v1406 = vadd.f32 %v1403, %v940
  %v1407 = vmul.f32 %v1405, %v1405
  %v1408 = vmul.f32 %v1406, %v1406
  %v1411 = vrot.slane %v1407, 3
  %v1412 = vrot.slane %v1408, 3
  %v1413 = vsel %vm383, %v1411, %v1412
  %v1417 = vsel %vm383, %v1406, %v1411
  %1418 = vmatpush.msra.mxu0 %v300
  %1419 = vmatpush.msra.mxu0 %v299
  %1420 = vmatpush.msra.mxu0 %v298
  %1421 = vmatpush.msra.mxu0 %v297
  %1422 = vmatpush.msra.mxu0 %v296
  %1423 = vmatpush.msra.mxu0 %v295
  %1424 = vmatpush.msra.mxu0 %v294
  %1425 = vmatpush.msra.mxu0 %v293
  %1426 = vmatpush.msra.mxu0 %v292
  %1427 = vmatpush.msra.mxu0 %v291
  %1428 = vmatpush.msra.mxu0 %v290
  %1429 = vmatpush.msra.mxu0 %v289
  %1430 = vmatpush.msra.mxu0 %v288
  %1431 = vmatpush.msra.mxu0 %v287
  %1432 = vmatpush.msra.mxu0 %v286
  %1433 = vmatpush.msra.mxu0 %v285
  %1434 = vmatmul.f32.gmra.mxu0 %v1405
  %v1435 = vpop.f32.mrf.mxu0
  %v1436 = vadd.f32 0.0, %v1435
  %1437 = vmatmul.f32.gmra.mxu0 %v1417
  %v1438 = vpop.f32.mrf.mxu0
  %v1439 = vadd.f32 0.0, %v1438
  %1440 = vmatmul.f32.gmra.mxu0 %v1413
  %v1441 = vpop.f32.mrf.mxu0
  %v1442 = vadd.f32 0.0, %v1441
  %1443 = vmatmul.f32.gmra.mxu0 %v1412
  %v1444 = vpop.f32.mrf.mxu0
  %v1445 = vadd.f32 0.0, %v1444
  %1446 = vdwg.mxu0
  %v1447 = vmul.f32 %v1436, %v1436
  %v1448 = vmul.f32 %v1439, %v1439
  %v1451 = vrot.slane %v1447, 3
  %v1452 = vrot.slane %v1448, 3
  %v1453 = vsel %vm383, %v1451, %v1452
  %v1457 = vsub.f32 %v1439, %v1451
  %v1458 = vsub.f32 %v1442, %v1453
  %v1459 = vsub.f32 %v1445, %v1452
  %v1460 = vsel %vm383, %v1439, %v1457
  %v1462 = vsel %vm843, %v1436, 0
  %v1465 = vsel %vm843, %v1460, 0
  %v1468 = vsel %vm843, %v1458, 0
  %v1471 = vsel %vm843, %v1459, 0
  %1473 = vmatpush.msra.mxu0 0.0
  %1474 = vmatpush.msra.mxu0 0.0
  %1475 = vmatpush.msra.mxu0 0.0
  %1476 = vmatpush.msra.mxu0 0.0
  %1477 = vmatpush.msra.mxu0 0.0
  %1478 = vmatpush.msra.mxu0 0.0
  %1479 = vmatpush.msra.mxu0 0.0
  %1480 = vmatpush.msra.mxu0 0.0
  %1481 = vmatpush.msra.mxu0 0.0
  %1482 = vmatpush.msra.mxu0 0.0
  %1483 = vmatpush.msra.mxu0 0.0
  %1484 = vmatpush.msra.mxu0 0.0
  %1485 = vmatpush.msra.mxu0 0.0
  %1486 = vmatpush.msra.mxu0 0.0
  %1487 = vmatpush.msra.mxu0 0.0
  %1488 = vmatpush.msra.mxu0 %v230
  %1489 = vmatmul.f32.gmra.mxu0 %v1462
  %v1490 = vpop.f32.mrf.mxu0
  %v1491 = vadd.f32 0.0, %v1490
  %1492 = vmatmul.f32.gmra.mxu0 %v1465
  %v1493 = vpop.f32.mrf.mxu0
  %v1494 = vadd.f32 0.0, %v1493
  %1495 = vmatmul.f32.gmra.mxu0 %v1468
  %v1496 = vpop.f32.mrf.mxu0
  %v1497 = vadd.f32 0.0, %v1496
  %1498 = vmatmul.f32.gmra.mxu0 %v1471
  %v1499 = vpop.f32.mrf.mxu0
  %v1500 = vadd.f32 0.0, %v1499
  %1501 = vdwg.mxu0
  %v1502 = vsub.f32 %v1405, %v1491
  %v1503 = vsub.f32 %v1406, %v1494
  %v1504 = vadd.f32 %v1494, 1e-05
  %v1505 = vadd.f32 %v1497, 1e-05
  %v1506 = vadd.f32 %v1500, 1e-05
  %v1507 = vrsqrt.pop %v1504
  %v1508 = vmul.f32 %v1507, %v1504
  %v1509 = vmul.f32 %v1508, %v1507
  %v1510 = vmul.f32 0.5, %v1509
  %v1511 = vsub.f32 1.5, %v1510
  %v1512 = vmul.f32 %v1507, %v1511
  %vm1513 = vweird.f32 %v1504
  %vm1514 = vweird.f32 %v1507
  %vm1515 = vmor %vm1513, %vm1514
  %v1516 = vsel %vm1515, %v1507, %v1512
  %v1517 = vrsqrt.pop %v1505
  %v1518 = vmul.f32 %v1517, %v1505
  %v1519 = vmul.f32 %v1518, %v1517
  %v1520 = vmul.f32 0.5, %v1519
  %v1521 = vsub.f32 1.5, %v1520
  %v1522 = vmul.f32 %v1517, %v1521
  %vm1523 = vweird.f32 %v1505
  %vm1524 = vweird.f32 %v1517
  %vm1525 = vmor %vm1523, %vm1524
  %v1526 = vsel %vm1525, %v1517, %v1522
  %v1527 = vrsqrt.pop %v1506
  %v1528 = vmul.f32 %v1527, %v1506
  %v1529 = vmul.f32 %v1528, %v1527
  %v1530 = vmul.f32 0.5, %v1529
  %v1531 = vsub.f32 1.5, %v1530
  %v1532 = vmul.f32 %v1527, %v1531
  %vm1533 = vweird.f32 %v1506
  %vm1534 = vweird.f32 %v1527
  %vm1535 = vmor %vm1533, %vm1534
  %v1536 = vsel %vm1535, %v1527, %v1532
  %v1540 = vrot.slane %v1516, 5
  %v1541 = vrot.slane %v1526, 5
  %v1542 = vsel %vm423, %v1540, %v1541
  %v1543 = vrot.slane %v1536, 5
  %v1544 = vsel %vm423, %v1541, %v1543
  %v1547 = vmul.f32 %v1502, %v1542
  %v1548 = vmul.f32 %v1503, %v1544
  %v1549 = vmul.f32 %v1547, %v932
  %v1550 = vmul.f32 %v1548, %v932
  %v1551 = vadd.f32 %v1549, %v935
  %v1552 = vadd.f32 %v1550, %v935
  %s1553 = smul.u32 8, 16
  %s1554 = smul.u32 %s1553, 4
  %s1555 = sshll.u32 %s1554, 4
  %1556 = dma.done [#allocation3], %s1555
  %v1557 = vld [vmem:[#allocation2] sm:$0xff]
  %v1558 = vld [vmem:[#allocation2 + $0x8] sm:$0xff]
  %v1559 = vld [vmem:[#allocation2 + $0x10] sm:$0xff]
  %v1560 = vld [vmem:[#allocation2 + $0x18] sm:$0xff]
  %v1561 = vld [vmem:[#allocation2 + $0x20] sm:$0xff]
  %v1562 = vld [vmem:[#allocation2 + $0x28] sm:$0xff]
  %v1563 = vld [vmem:[#allocation2 + $0x30] sm:$0xff]
  %v1564 = vld [vmem:[#allocation2 + $0x38] sm:$0xff]
  %v1565 = vld [vmem:[#allocation2 + $0x40] sm:$0xff]
  %v1566 = vld [vmem:[#allocation2 + $0x48] sm:$0xff]
  %v1567 = vld [vmem:[#allocation2 + $0x50] sm:$0xff]
  %v1568 = vld [vmem:[#allocation2 + $0x58] sm:$0xff]
  %v1569 = vld [vmem:[#allocation2 + $0x60] sm:$0xff]
  %v1570 = vld [vmem:[#allocation2 + $0x68] sm:$0xff]
  %v1571 = vld [vmem:[#allocation2 + $0x70] sm:$0xff]
  %v1572 = vld [vmem:[#allocation2 + $0x78] sm:$0xff]
  %v1573 = vld [vmem:[#allocation2 + $0x80] sm:$0xff]
  %v1574 = vld [vmem:[#allocation2 + $0x88] sm:$0xff]
  %v1575 = vld [vmem:[#allocation2 + $0x90] sm:$0xff]
  %v1576 = vld [vmem:[#allocation2 + $0x98] sm:$0xff]
  %v1577 = vld [vmem:[#allocation2 + $0xa0] sm:$0xff]
  %v1578 = vld [vmem:[#allocation2 + $0xa8] sm:$0xff]
  %v1579 = vld [vmem:[#allocation2 + $0xb0] sm:$0xff]
  %v1580 = vld [vmem:[#allocation2 + $0xb8] sm:$0xff]
  %v1581 = vld [vmem:[#allocation2 + $0xc0] sm:$0xff]
  %v1582 = vld [vmem:[#allocation2 + $0xc8] sm:$0xff]
  %v1583 = vld [vmem:[#allocation2 + $0xd0] sm:$0xff]
  %v1584 = vld [vmem:[#allocation2 + $0xd8] sm:$0xff]
  %v1585 = vld [vmem:[#allocation2 + $0xe0] sm:$0xff]
  %v1586 = vld [vmem:[#allocation2 + $0xe8] sm:$0xff]
  %v1587 = vld [vmem:[#allocation2 + $0xf0] sm:$0xff]
  %v1588 = vld [vmem:[#allocation2 + $0xf8] sm:$0xff]
  %v1589 = vld [vmem:[#allocation2 + $0x100] sm:$0xff]
  %v1590 = vld [vmem:[#allocation2 + $0x108] sm:$0xff]
  %v1591 = vld [vmem:[#allocation2 + $0x110] sm:$0xff]
  %v1592 = vld [vmem:[#allocation2 + $0x118] sm:$0xff]
  %v1593 = vld [vmem:[#allocation2 + $0x120] sm:$0xff]
  %v1594 = vld [vmem:[#allocation2 + $0x128] sm:$0xff]
  %v1595 = vld [vmem:[#allocation2 + $0x130] sm:$0xff]
  %v1596 = vld [vmem:[#allocation2 + $0x138] sm:$0xff]
  %v1597 = vld [vmem:[#allocation2 + $0x140] sm:$0xff]
  %v1598 = vld [vmem:[#allocation2 + $0x148] sm:$0xff]
  %v1599 = vld [vmem:[#allocation2 + $0x150] sm:$0xff]
  %v1600 = vld [vmem:[#allocation2 + $0x158] sm:$0xff]
  %v1601 = vld [vmem:[#allocation2 + $0x160] sm:$0xff]
  %v1602 = vld [vmem:[#allocation2 + $0x168] sm:$0xff]
  %v1603 = vld [vmem:[#allocation2 + $0x170] sm:$0xff]
  %v1604 = vld [vmem:[#allocation2 + $0x178] sm:$0xff]
  %v1605 = vld [vmem:[#allocation2 + $0x180] sm:$0xff]
  %v1606 = vld [vmem:[#allocation2 + $0x188] sm:$0xff]
  %v1607 = vld [vmem:[#allocation2 + $0x190] sm:$0xff]
  %v1608 = vld [vmem:[#allocation2 + $0x198] sm:$0xff]
  %v1609 = vld [vmem:[#allocation2 + $0x1a0] sm:$0xff]
  %v1610 = vld [vmem:[#allocation2 + $0x1a8] sm:$0xff]
  %v1611 = vld [vmem:[#allocation2 + $0x1b0] sm:$0xff]
  %v1612 = vld [vmem:[#allocation2 + $0x1b8] sm:$0xff]
  %v1613 = vld [vmem:[#allocation2 + $0x1c0] sm:$0xff]
  %v1614 = vld [vmem:[#allocation2 + $0x1c8] sm:$0xff]
  %v1615 = vld [vmem:[#allocation2 + $0x1d0] sm:$0xff]
  %v1616 = vld [vmem:[#allocation2 + $0x1d8] sm:$0xff]
  %v1617 = vld [vmem:[#allocation2 + $0x1e0] sm:$0xff]
  %v1618 = vld [vmem:[#allocation2 + $0x1e8] sm:$0xff]
  %v1619 = vld [vmem:[#allocation2 + $0x1f0] sm:$0xff]
  %v1620 = vld [vmem:[#allocation2 + $0x1f8] sm:$0xff]
  %1621 = vmatpush.msra.mxu0 %v1617
  %1622 = vmatpush.msra.mxu0 %v1613
  %1623 = vmatpush.msra.mxu0 %v1609
  %1624 = vmatpush.msra.mxu0 %v1605
  %1625 = vmatpush.msra.mxu0 %v1601
  %1626 = vmatpush.msra.mxu0 %v1597
  %1627 = vmatpush.msra.mxu0 %v1593
  %1628 = vmatpush.msra.mxu0 %v1589
  %1629 = vmatpush.msra.mxu0 %v1585
  %1630 = vmatpush.msra.mxu0 %v1581
  %1631 = vmatpush.msra.mxu0 %v1577
  %1632 = vmatpush.msra.mxu0 %v1573
  %1633 = vmatpush.msra.mxu0 %v1569
  %1634 = vmatpush.msra.mxu0 %v1565
  %1635 = vmatpush.msra.mxu0 %v1561
  %1636 = vmatpush.msra.mxu0 %v1557
  %1637 = vmatmul.f32.gmra.mxu0 %v1551
  %v1638 = vpop.f32.mrf.mxu0
  %v1639 = vadd.f32 0.0, %v1638
  %1640 = vmatmul.f32.gmra.mxu0 %v1552
  %v1641 = vpop.f32.mrf.mxu0
  %1642 = vdwg.mxu0
  %1643 = vmatpush.msra.mxu0 %v1618
  %1644 = vmatpush.msra.mxu0 %v1614
  %1645 = vmatpush.msra.mxu0 %v1610
  %1646 = vmatpush.msra.mxu0 %v1606
  %1647 = vmatpush.msra.mxu0 %v1602
  %1648 = vmatpush.msra.mxu0 %v1598
  %1649 = vmatpush.msra.mxu0 %v1594
  %1650 = vmatpush.msra.mxu0 %v1590
  %1651 = vmatpush.msra.mxu0 %v1586
  %1652 = vmatpush.msra.mxu0 %v1582
  %1653 = vmatpush.msra.mxu0 %v1578
  %1654 = vmatpush.msra.mxu0 %v1574
  %1655 = vmatpush.msra.mxu0 %v1570
  %1656 = vmatpush.msra.mxu0 %v1566
  %1657 = vmatpush.msra.mxu0 %v1562
  %1658 = vmatpush.msra.mxu0 %v1558
  %1659 = vmatmul.f32.gmra.mxu0 %v1551
  %v1660 = vpop.f32.mrf.mxu0
  %v1661 = vadd.f32 0.0, %v1660
  %1662 = vmatmul.f32.gmra.mxu0 %v1552
  %v1663 = vpop.f32.mrf.mxu0
  %1664 = vdwg.mxu0
  %1665 = vmatpush.msra.mxu0 %v1619
  %1666 = vmatpush.msra.mxu0 %v1615
  %1667 = vmatpush.msra.mxu0 %v1611
  %1668 = vmatpush.msra.mxu0 %v1607
  %1669 = vmatpush.msra.mxu0 %v1603
  %1670 = vmatpush.msra.mxu0 %v1599
  %1671 = vmatpush.msra.mxu0 %v1595
  %1672 = vmatpush.msra.mxu0 %v1591
  %1673 = vmatpush.msra.mxu0 %v1587
  %1674 = vmatpush.msra.mxu0 %v1583
  %1675 = vmatpush.msra.mxu0 %v1579
  %1676 = vmatpush.msra.mxu0 %v1575
  %1677 = vmatpush.msra.mxu0 %v1571
  %1678 = vmatpush.msra.mxu0 %v1567
  %1679 = vmatpush.msra.mxu0 %v1563
  %1680 = vmatpush.msra.mxu0 %v1559
  %1681 = vmatmul.f32.gmra.mxu0 %v1551
  %v1682 = vpop.f32.mrf.mxu0
  %1683 = vmatmul.f32.gmra.mxu0 %v1552
  %v1684 = vpop.f32.mrf.mxu0
  %v1685 = vadd.f32 0.0, %v1684
  %1686 = vdwg.mxu0
  %1687 = vmatpush.msra.mxu0 %v1620
  %1688 = vmatpush.msra.mxu0 %v1616
  %1689 = vmatpush.msra.mxu0 %v1612
  %1690 = vmatpush.msra.mxu0 %v1608
  %1691 = vmatpush.msra.mxu0 %v1604
  %1692 = vmatpush.msra.mxu0 %v1600
  %1693 = vmatpush.msra.mxu0 %v1596
  %1694 = vmatpush.msra.mxu0 %v1592
  %1695 = vmatpush.msra.mxu0 %v1588
  %1696 = vmatpush.msra.mxu0 %v1584
  %1697 = vmatpush.msra.mxu0 %v1580
  %1698 = vmatpush.msra.mxu0 %v1576
  %1699 = vmatpush.msra.mxu0 %v1572
  %1700 = vmatpush.msra.mxu0 %v1568
  %1701 = vmatpush.msra.mxu0 %v1564
  %1702 = vmatpush.msra.mxu0 %v1560
  %1703 = vmatmul.f32.gmra.mxu0 %v1551
  %v1704 = vpop.f32.mrf.mxu0
  %1705 = vmatmul.f32.gmra.mxu0 %v1552
  %v1706 = vpop.f32.mrf.mxu0
  %v1707 = vadd.f32 0.0, %v1706
  %1708 = vdwg.mxu0
  %v1710 = vrot.slane %v1639, 1
  %1711 = vrot.lane.b32.xlu0 %v1710, 96
  %v1712 = vpop.permute.xlu0 %1711
  %v1714 = vadd.f32 %v1639, %v1712
  %v1715 = vrot.slane %v1639, 2
  %1716 = vrot.lane.b32.xlu0 %v1715, 64
  %v1717 = vpop.permute.xlu0 %1716
  %v1719 = vadd.f32 %v1714, %v1717
  %v1720 = vrot.slane %v1639, 3
  %1721 = vrot.lane.b32.xlu0 %v1720, 32
  %v1722 = vpop.permute.xlu0 %1721
  %v1724 = vadd.f32 %v1719, %v1722
  %v1726 = vrot.slane %v1661, 4
  %v1728 = vadd.f32 %v1724, %v1726
  %v1729 = vrot.slane %v1661, 5
  %1730 = vrot.lane.b32.xlu0 %v1729, 96
  %v1731 = vpop.permute.xlu0 %1730
  %v1733 = vadd.f32 %v1728, %v1731
  %v1734 = vrot.slane %v1661, 6
  %1735 = vrot.lane.b32.xlu0 %v1734, 64
  %v1736 = vpop.permute.xlu0 %1735
  %v1738 = vadd.f32 %v1733, %v1736
  %v1739 = vrot.slane %v1661, 7
  %1740 = vrot.lane.b32.xlu0 %v1739, 32
  %v1741 = vpop.permute.xlu0 %1740
  %v1743 = vadd.f32 %v1738, %v1741
  %v1744 = vadd.f32 %v1743, %v1685
  %v1746 = vrot.slane %v1685, 1
  %1747 = vrot.lane.b32.xlu0 %v1746, 96
  %v1748 = vpop.permute.xlu0 %1747
  %v1750 = vadd.f32 %v1744, %v1748
  %v1751 = vrot.slane %v1685, 2
  %1752 = vrot.lane.b32.xlu0 %v1751, 64
  %v1753 = vpop.permute.xlu0 %1752
  %v1755 = vadd.f32 %v1750, %v1753
  %v1756 = vrot.slane %v1685, 3
  %1757 = vrot.lane.b32.xlu0 %v1756, 32
  %v1758 = vpop.permute.xlu0 %1757
  %v1760 = vadd.f32 %v1755, %v1758
  %v1762 = vrot.slane %v1707, 4
  %v1764 = vadd.f32 %v1760, %v1762
  %vm1765 = vcmask 261120
  %v1766 = vsel %vm1765, %v1764, 0.0
  %v1767 = vrot.slane %v229, 6
  %v1769 = vadd.f32 %v1766, %v1767
  %1770 = vst [vmem:[%s6] sm:$0x1] %v1769
  // Predicated region
  $region41: #{decoder_forward.1} parent=0 // pred_check
    _
  $region42: #{decoder_forward.1} parent=0 // pred_check_branch
    %1772 = sbr.rel (0) target = $region44
  $region43: #{decoder_forward.1} parent=0 // pred_region
    _
  $region44: #{decoder_forward.1} parent=0 // pred_fallthru
    _
  // Predicated region
  $region45: #{decoder_forward.1} parent=0 // pred_check
    _
  $region46: #{decoder_forward.1} parent=0 // pred_check_branch
    %1774 = sbr.rel (0) target = $region48
  $region47: #{decoder_forward.1} parent=0 // pred_region
    _
  $region48: #{decoder_forward.1} parent=0 // pred_fallthru
    _
  %1775 = vsyncmov [#allocation3]
  %s1776 = vpop.sfrf %1775
  %p1777 = scmp.eq.s32.totalorder %s1776, 0
  %p1778 = pneg %p1777
  %1780 = shalt.err (%p1778)

</llo_original>
